<compile_context>
chip_gen: v7x
topology: tpu7x:2x2x1
jax: 0.10.0
libtpu: 0.0.40
codegen_flags: <defaults>
</compile_context>

<pallas_src>
import math

import jax
import jax.numpy as jnp
from jax.experimental import pallas as pl
from jax.experimental.pallas import tpu as pltpu

# ----------------------- cfg : small shapes consistent with the module ------------------
B, T, N = 2, 2, 12            # batch, num_frames, num_boxes (KNN hardcodes 12 boxes)
K = 2                         # crop_size = (2, 2)
D = 64                        # emb_features  -> K*K*D = 256
NFB = 128                     # num_features_boxes
NFG = 128                     # num_features_gcn (must equal NFB in the module)
NFR = 128                     # num_features_relation
NG = 2                        # num_graph
GCN_LAYERS = 1                # gcn_layers
NUM_ACTIONS = 9               # num_actions
NUM_ACTIVITIES = 8            # num_activities
OH, OW = 16, 16               # out_size
POS_THRESHOLD = 0.2           # pos_threshold
TRAIN_DROPOUT_PROB = 0.0      # dropout with p=0.0 is the identity (training mode)
TN = T * N
DIN = K * K * D
OUT_ROWS = 16                 # N (boxes) + 1 (pooled row), padded up to a multiple of 8
OUT_LANES = 128               # NUM_ACTIONS + NUM_ACTIVITIES padded to a full lane tile

MASK_NEG = -1e30              # large finite negative: the diagonal (dist=0) is never
                              # masked, so this is numerically identical to -inf here
USE_APPROX_RECIPROCAL = True  # EUP vrcp for the softmax denominator (~1e-3 rel error)


def _softmax_last(s):
    s_max = jnp.max(s, axis=-1, keepdims=True)
    p = jnp.exp(s - s_max)
    denom = jnp.sum(p, axis=-1, keepdims=True)
    if USE_APPROX_RECIPROCAL:
        return p * pl.reciprocal(denom, approx=True)
    return p / denom


# ======================= fused kernel: emb + GCN module + heads =========================
def _fused_kernel(scale_ref, x_ref, mask_ref,
                  w_emb_ref, b_emb_ref, ln1_g_ref, ln1_b_ref,
                  wtp_ref, btp_ref, gcn_w_ref, lng_ref, lnb_ref,
                  wh_ref, bh_ref,
                  out_ref):
    # ---------------- fc_emb_1 (Linear K*K*D -> NFB) + LayerNorm(NFB) + ReLU ------------
    y = jnp.dot(x_ref[...], w_emb_ref[...],
                preferred_element_type=jnp.float32) + b_emb_ref[...]
    mu = jnp.mean(y, axis=-1, keepdims=True)                             # single-pass LN
    var = jnp.mean(y * y, axis=-1, keepdims=True) - mu * mu
    y = (y - mu) * jax.lax.rsqrt(var + 1e-5)
    emb = jnp.maximum(y * ln1_g_ref[...] + ln1_b_ref[...], 0.0)          # (TN, NFB)

    # ---------------- GCN_Module: NG graphs unrolled, weights loaded once ---------------
    mask = mask_ref[...]                                                 # (TN, TN), 1.0 = masked
    inv_sqrt_nfr = jnp.float32(1.0 / math.sqrt(NFR))
    feat = emb
    for _ in range(GCN_LAYERS):                                          # gcn_layers (=1)
        # theta|phi of all graphs in ONE (TN, NFG) x (NFG, NG*2*NFR) matmul (512-wide RHS)
        tp = jnp.dot(feat, wtp_ref[...],
                     preferred_element_type=jnp.float32) + btp_ref[...]  # (TN, NG*2*NFR)
        # reassociated fc_gcn: fg = feat @ [gcn_w_0 | gcn_w_1], ONE 256-wide-RHS matmul
        fg = jnp.dot(feat, gcn_w_ref[...],
                     preferred_element_type=jnp.float32)                 # (TN, NG*NFG)
        graph = jnp.zeros((TN, NFG), jnp.float32)
        for g in range(NG):
            theta = tp[:, (2 * g) * NFR:(2 * g + 1) * NFR]               # (TN, NFR)
            phi = tp[:, (2 * g + 1) * NFR:(2 * g + 2) * NFR]             # (TN, NFR)
            # similarity = theta @ phi^T / sqrt(NFR)
            s = jax.lax.dot_general(theta, phi, (((1,), (1,)), ((), ())),
                                    preferred_element_type=jnp.float32)
            s = s * inv_sqrt_nfr
            # relation_graph[position_mask] = -inf ; softmax over last dim
            s = jnp.where(mask != 0.0, jnp.float32(MASK_NEG), s)
            rel = _softmax_last(s)                                       # (TN, TN)
            # z_g = rel_g @ (feat @ gcn_w_g)  ==  (rel_g @ feat) @ gcn_w_g
            z = jnp.dot(rel, fg[:, g * NFG:(g + 1) * NFG],
                        preferred_element_type=jnp.float32)              # (TN, NFG)
            # LayerNorm([T*N, NFG]): normalize jointly over both trailing dims (single pass)
            zmu = jnp.mean(z)
            zvar = jnp.mean(z * z) - zmu * zmu
            z = (z - zmu) * jax.lax.rsqrt(zvar + 1e-5)
            z = jnp.maximum(z * lng_ref[g] + lnb_ref[g], 0.0)
            graph = graph + z                                            # sum over graphs
        feat = graph

    # ---------------- heads: average-then-matmul (affine head commutes with mean_T) -----
    # boxes_states = boxes_features + graph * (1 - x);  dropout(p=0.0) is identity
    s_scale = scale_ref[0]
    bs_all = emb + feat * s_scale                                        # (TN, NFG)
    bs_sum = jnp.zeros((N, NFG), jnp.float32)
    pooled_sum = jnp.zeros((1, NFG), jnp.float32)
    for t in range(T):
        frame = bs_all[t * N:(t + 1) * N, :]                             # (N, NFG)
        bs_sum = bs_sum + frame
        pooled_sum = pooled_sum + jnp.max(frame, axis=0, keepdims=True)  # max over boxes
    inv_t = jnp.float32(1.0 / T)
    operand = jnp.concatenate(
        [bs_sum * inv_t,                                                 # rows 0..N-1
         pooled_sum * inv_t,                                             # row N
         jnp.zeros((OUT_ROWS - N - 1, NFG), jnp.float32)], axis=0)       # pad to 16 rows
    # ONE (16,128)x(128,128) matmul + one bias add + one unmasked lane-dense store
    out_ref[...] = jnp.dot(operand, wh_ref[...],
                           preferred_element_type=jnp.float32) + bh_ref[...]


def _fused_forward_call(scale, x, pos_mask, p):
    Bv = x.shape[0]
    # NOTE: all weight BlockSpecs have constant index_maps; they are DMA'd once.
    # (pipeline_mode=pl.Buffered(1) could drop the second buffer; left at default for safety.)
    return pl.pallas_call(
        _fused_kernel,
        out_shape=jax.ShapeDtypeStruct((Bv, OUT_ROWS, OUT_LANES), jnp.float32),
        grid=(Bv,),
        in_specs=[
            pl.BlockSpec(memory_space=pltpu.MemorySpace.SMEM),           # scale = 1 - x
            pl.BlockSpec((pl.Squeezed(), TN, DIN), lambda b: (b, 0, 0)), # RoI crop features
            pl.BlockSpec((pl.Squeezed(), TN, TN), lambda b: (b, 0, 0)),  # position mask
            pl.BlockSpec((DIN, NFB), lambda b: (0, 0)),                  # fc_emb_1 W^T
            pl.BlockSpec((1, NFB), lambda b: (0, 0)),                    # fc_emb_1 b
            pl.BlockSpec((1, NFB), lambda b: (0, 0)),                    # nl_emb_1 gamma
            pl.BlockSpec((1, NFB), lambda b: (0, 0)),                    # nl_emb_1 beta
            pl.BlockSpec((NFG, NG * 2 * NFR), lambda b: (0, 0)),         # [theta|phi] W^T, all graphs
            pl.BlockSpec((1, NG * 2 * NFR), lambda b: (0, 0)),           # [theta|phi] b
            pl.BlockSpec((NFG, NG * NFG), lambda b: (0, 0)),             # [fc_gcn_0|fc_gcn_1] W^T
            pl.BlockSpec((NG, TN, NFG), lambda b: (0, 0, 0)),            # nl_gcn gamma
            pl.BlockSpec((NG, TN, NFG), lambda b: (0, 0, 0)),            # nl_gcn beta
            pl.BlockSpec((NFG, OUT_LANES), lambda b: (0, 0)),            # [fc_actions|fc_activities] W^T (padded)
            pl.BlockSpec((1, OUT_LANES), lambda b: (0, 0)),              # [b_act|b_actv] (padded)
        ],
        out_specs=pl.BlockSpec((pl.Squeezed(), OUT_ROWS, OUT_LANES), lambda b: (b, 0, 0)),
        compiler_params=pltpu.CompilerParams(
            dimension_semantics=("parallel",)),                          # 1 batch / TC on v7x
    )(scale, x, pos_mask,
      p["w_emb"], p["b_emb"], p["ln1_g"], p["ln1_b"],
      p["w_tp"], p["b_tp"], p["gcn_w"], p["ln_gcn_g"], p["ln_gcn_b"],
      p["w_heads"], p["b_heads"])


# ======================= parameter init (deterministic, kaiming_normal_) ================
def _kaiming(key, out_f, in_f):
    return math.sqrt(2.0 / in_f) * jax.random.normal(key, (out_f, in_f), jnp.float32)


def init_params(key):
    ks = jax.random.split(key, 4 + 3 * NG)
    p = {}
    p["w_emb"] = _kaiming(ks[0], NFB, DIN).T                             # (DIN, NFB)
    p["b_emb"] = jnp.zeros((1, NFB), jnp.float32)
    p["ln1_g"] = jnp.ones((1, NFB), jnp.float32)
    p["ln1_b"] = jnp.zeros((1, NFB), jnp.float32)
    theta_w = [_kaiming(ks[4 + i], NFR, NFG).T for i in range(NG)]       # (NFG, NFR)
    phi_w = [_kaiming(ks[4 + NG + i], NFR, NFG).T for i in range(NG)]
    # pack [theta_g | phi_g] for every graph along the output dim -> one wide MXU matmul
    p["w_tp"] = jnp.concatenate(
        [jnp.concatenate([theta_w[g], phi_w[g]], axis=1) for g in range(NG)], axis=1)
    p["b_tp"] = jnp.zeros((1, NG * 2 * NFR), jnp.float32)                # biases init to 0
    # fc_gcn W^T (no bias), concatenated along the output (lane) dim -> one 256-wide RHS
    p["gcn_w"] = jnp.concatenate(
        [_kaiming(ks[4 + 2 * NG + i], NFG, NFG).T for i in range(NG)], axis=1)
    p["ln_gcn_g"] = jnp.ones((NG, TN, NFG), jnp.float32)
    p["ln_gcn_b"] = jnp.zeros((NG, TN, NFG), jnp.float32)
    w_act = _kaiming(ks[1], NUM_ACTIONS, NFG).T                          # (NFG, 9)
    w_actv = _kaiming(ks[2], NUM_ACTIVITIES, NFG).T                      # (NFG, 8)
    wh = jnp.zeros((NFG, OUT_LANES), jnp.float32)                        # lane-dense, padded
    wh = wh.at[:, :NUM_ACTIONS].set(w_act)
    wh = wh.at[:, NUM_ACTIONS:NUM_ACTIONS + NUM_ACTIVITIES].set(w_actv)
    p["w_heads"] = wh
    p["b_heads"] = jnp.zeros((1, OUT_LANES), jnp.float32)                # both biases are 0
    p["integration"] = jnp.zeros((1,), jnp.float32)                      # nn.Parameter([0.0])
    return p


# ======================= forward pass (jitted) ==========================================
@jax.jit
def gcnnet_volleyball_forward(roi_features, boxes_in, params):
    # TODO(synk): pretrained CNN backbone (Inception-v3 / VGG) + RoIAlign have no clean
    # in-script Pallas equivalent; the forward starts from the RoIAlign'ed crop features.
    Bv = roi_features.shape[0]
    x = roi_features.reshape(Bv, TN, DIN).astype(jnp.float32)

    # TODO(synk): KNN / RAM_process branch (python control flow + per-row scatter, hard-
    # coded to 1024-dim features) is a numerical no-op at the deterministic init because
    # self.x = abs(tanh(0)/2) == 0, so boxes_features stays equal to boxes_features_copy.

    # positional mask for the relation graph (tiny; fused by XLA under jit)
    boxes = boxes_in.reshape(Bv, TN, 4).astype(jnp.float32)
    cx = (boxes[..., 0] + boxes[..., 2]) * 0.5
    cy = (boxes[..., 1] + boxes[..., 3]) * 0.5
    pos = jnp.stack([cx, cy], axis=-1)                                   # (B, TN, 2)
    diff = pos[:, :, None, :] - pos[:, None, :, :]
    dist = jnp.sqrt(jnp.sum(diff * diff, axis=-1))
    pos_mask = (dist > POS_THRESHOLD * OW).astype(jnp.float32)           # (B, TN, TN)

    # scale = 1 - x with x = abs(tanh(integration)/2)
    scale = (1.0 - jnp.abs(jnp.tanh(params["integration"]) / 2.0)).reshape(1)

    out = _fused_forward_call(scale, x, pos_mask, params)                # (B, 16, 128)
    actions_scores = out[:, :N, :NUM_ACTIONS].reshape(Bv * N, NUM_ACTIONS)
    activities_scores = out[:, N, NUM_ACTIONS:NUM_ACTIONS + NUM_ACTIVITIES]
    return actions_scores, activities_scores


# ======================= main ============================================================
if __name__ == "__main__":
    key = jax.random.PRNGKey(0)
    k_feat, k_box, k_params = jax.random.split(key, 3)

    roi_features = jax.random.normal(k_feat, (B, T, N, DIN), jnp.float32)
    # boxes in out_size coordinates: (x1, y1, x2, y2)
    xy = jax.random.uniform(k_box, (B, T, N, 2), jnp.float32, 0.0, OW - 2.0)
    wh = jax.random.uniform(jax.random.fold_in(k_box, 1), (B, T, N, 2), jnp.float32, 1.0, 2.0)
    boxes_in = jnp.concatenate([xy, xy + wh], axis=-1)                   # (B, T, N, 4)

    params = init_params(k_params)

    actions_scores, activities_scores = gcnnet_volleyball_forward(roi_features, boxes_in, params)
    actions_scores = jax.block_until_ready(actions_scores)
    activities_scores = jax.block_until_ready(activities_scores)

    assert actions_scores.shape == (B * N, NUM_ACTIONS)
    assert activities_scores.shape == (B, NUM_ACTIVITIES)
    assert bool(jnp.all(jnp.isfinite(actions_scores)))
    assert bool(jnp.all(jnp.isfinite(activities_scores)))
    print("KERNEL_OK")
</pallas_src>

<mosaic_0001>
module attributes {stable_mosaic.version = 11 : i64} {
  func.func @_fused_kernel(%arg0: i32, %arg1: memref<1xf32, #tpu.memory_space<smem>>, %arg2: memref<1x24x256xf32, #tpu.memory_space<vmem>>, %arg3: memref<1x24x24xf32, #tpu.memory_space<vmem>>, %arg4: memref<256x128xf32, #tpu.memory_space<vmem>>, %arg5: memref<1x128xf32, #tpu.memory_space<vmem>>, %arg6: memref<1x128xf32, #tpu.memory_space<vmem>>, %arg7: memref<1x128xf32, #tpu.memory_space<vmem>>, %arg8: memref<128x512xf32, #tpu.memory_space<vmem>>, %arg9: memref<1x512xf32, #tpu.memory_space<vmem>>, %arg10: memref<128x256xf32, #tpu.memory_space<vmem>>, %arg11: memref<2x24x128xf32, #tpu.memory_space<vmem>>, %arg12: memref<2x24x128xf32, #tpu.memory_space<vmem>>, %arg13: memref<128x128xf32, #tpu.memory_space<vmem>>, %arg14: memref<1x128xf32, #tpu.memory_space<vmem>>, %arg15: memref<1x16x128xf32, #tpu.memory_space<vmem>>) attributes {dimension_semantics = [#tpu.dimension_semantics<parallel>], iteration_bounds = array<i64: 2>, scalar_prefetch = 0 : i64, scratch_operands = 0 : i64, tpu.core_type = #tpu.core_type<tc>, window_params = [{transform_indices = @transform_0, window_bounds = array<i64: 1>}, {transform_indices = @transform_1, window_bounds = array<i64: 1, 24, 256>}, {transform_indices = @transform_2, window_bounds = array<i64: 1, 24, 24>}, {pipeline_mode = #tpu.pipeline_mode<synchronous>, transform_indices = @transform_3, window_bounds = array<i64: 256, 128>}, {pipeline_mode = #tpu.pipeline_mode<synchronous>, transform_indices = @transform_4, window_bounds = array<i64: 1, 128>}, {pipeline_mode = #tpu.pipeline_mode<synchronous>, transform_indices = @transform_5, window_bounds = array<i64: 1, 128>}, {pipeline_mode = #tpu.pipeline_mode<synchronous>, transform_indices = @transform_6, window_bounds = array<i64: 1, 128>}, {pipeline_mode = #tpu.pipeline_mode<synchronous>, transform_indices = @transform_7, window_bounds = array<i64: 128, 512>}, {pipeline_mode = #tpu.pipeline_mode<synchronous>, transform_indices = @transform_8, window_bounds = array<i64: 1, 512>}, {pipeline_mode = #tpu.pipeline_mode<synchronous>, transform_indices = @transform_9, window_bounds = array<i64: 128, 256>}, {pipeline_mode = #tpu.pipeline_mode<synchronous>, transform_indices = @transform_10, window_bounds = array<i64: 2, 24, 128>}, {pipeline_mode = #tpu.pipeline_mode<synchronous>, transform_indices = @transform_11, window_bounds = array<i64: 2, 24, 128>}, {pipeline_mode = #tpu.pipeline_mode<synchronous>, transform_indices = @transform_12, window_bounds = array<i64: 128, 128>}, {pipeline_mode = #tpu.pipeline_mode<synchronous>, transform_indices = @transform_13, window_bounds = array<i64: 1, 128>}, {transform_indices = @transform_14, window_bounds = array<i64: 1, 16, 128>}]} {
    %c0 = arith.constant 0 : index
    %c0_0 = arith.constant 0 : index
    %c0_1 = arith.constant 0 : index
    %0 = vector.load %arg2[%c0, %c0_0, %c0_1] : memref<1x24x256xf32, #tpu.memory_space<vmem>>, vector<1x24x256xf32>
    %1 = vector.shape_cast %0 : vector<1x24x256xf32> to vector<24x256xf32>
    %c0_2 = arith.constant 0 : index
    %c0_3 = arith.constant 0 : index
    %2 = vector.load %arg4[%c0_2, %c0_3] : memref<256x128xf32, #tpu.memory_space<vmem>>, vector<256x128xf32>
    %cst = arith.constant dense<0.000000e+00> : vector<24x128xf32>
    %3 = tpu.matmul %1, %2, %cst {dimension_numbers = #tpu.dot_dimension_numbers<[1], [0], [0], [1], [0, 0, 1, 1], [], []>} : vector<24x256xf32>, vector<256x128xf32>, vector<24x128xf32> -> vector<24x128xf32>
    %c0_4 = arith.constant 0 : index
    %c0_5 = arith.constant 0 : index
    %4 = vector.load %arg5[%c0_4, %c0_5] : memref<1x128xf32, #tpu.memory_space<vmem>>, vector<1x128xf32>
    %5 = vector.broadcast %4 : vector<1x128xf32> to vector<24x128xf32>
    %6 = arith.addf %3, %5 : vector<24x128xf32>
    %cst_6 = arith.constant dense<0.000000e+00> : vector<24xf32>
    %7 = vector.multi_reduction <add>, %6, %cst_6 [1] : vector<24x128xf32> to vector<24xf32>
    %8 = vector.shape_cast %7 : vector<24xf32> to vector<24x1xf32>
    %cst_7 = arith.constant 1.280000e+02 : f32
    %9 = vector.broadcast %cst_7 : f32 to vector<24x1xf32>
    %10 = arith.divf %8, %9 : vector<24x1xf32>
    %11 = arith.mulf %6, %6 : vector<24x128xf32>
    %cst_8 = arith.constant dense<0.000000e+00> : vector<24xf32>
    %12 = vector.multi_reduction <add>, %11, %cst_8 [1] : vector<24x128xf32> to vector<24xf32>
    %13 = vector.shape_cast %12 : vector<24xf32> to vector<24x1xf32>
    %cst_9 = arith.constant 1.280000e+02 : f32
    %14 = vector.broadcast %cst_9 : f32 to vector<24x1xf32>
    %15 = arith.divf %13, %14 : vector<24x1xf32>
    %16 = arith.mulf %10, %10 : vector<24x1xf32>
    %17 = arith.subf %15, %16 : vector<24x1xf32>
    %18 = vector.broadcast %10 : vector<24x1xf32> to vector<24x128xf32>
    %19 = arith.subf %6, %18 : vector<24x128xf32>
    %cst_10 = arith.constant 9.99999974E-6 : f32
    %20 = vector.broadcast %cst_10 : f32 to vector<24x1xf32>
    %21 = arith.addf %17, %20 : vector<24x1xf32>
    %22 = math.rsqrt %21 : vector<24x1xf32>
    %23 = vector.broadcast %22 : vector<24x1xf32> to vector<24x128xf32>
    %24 = arith.mulf %19, %23 : vector<24x128xf32>
    %c0_11 = arith.constant 0 : index
    %c0_12 = arith.constant 0 : index
    %25 = vector.load %arg6[%c0_11, %c0_12] : memref<1x128xf32, #tpu.memory_space<vmem>>, vector<1x128xf32>
    %26 = vector.broadcast %25 : vector<1x128xf32> to vector<24x128xf32>
    %27 = arith.mulf %24, %26 : vector<24x128xf32>
    %c0_13 = arith.constant 0 : index
    %c0_14 = arith.constant 0 : index
    %28 = vector.load %arg7[%c0_13, %c0_14] : memref<1x128xf32, #tpu.memory_space<vmem>>, vector<1x128xf32>
    %29 = vector.broadcast %28 : vector<1x128xf32> to vector<24x128xf32>
    %30 = arith.addf %27, %29 : vector<24x128xf32>
    %cst_15 = arith.constant 0.000000e+00 : f32
    %31 = vector.broadcast %cst_15 : f32 to vector<24x128xf32>
    %32 = arith.maximumf %30, %31 : vector<24x128xf32>
    %c0_16 = arith.constant 0 : index
    %c0_17 = arith.constant 0 : index
    %c0_18 = arith.constant 0 : index
    %33 = vector.load %arg3[%c0_16, %c0_17, %c0_18] : memref<1x24x24xf32, #tpu.memory_space<vmem>>, vector<1x24x24xf32>
    %34 = vector.shape_cast %33 : vector<1x24x24xf32> to vector<24x24xf32>
    %c0_19 = arith.constant 0 : index
    %c0_20 = arith.constant 0 : index
    %35 = vector.load %arg8[%c0_19, %c0_20] : memref<128x512xf32, #tpu.memory_space<vmem>>, vector<128x512xf32>
    %cst_21 = arith.constant dense<0.000000e+00> : vector<24x512xf32>
    %36 = tpu.matmul %32, %35, %cst_21 {dimension_numbers = #tpu.dot_dimension_numbers<[1], [0], [0], [1], [0, 0, 1, 1], [], []>} : vector<24x128xf32>, vector<128x512xf32>, vector<24x512xf32> -> vector<24x512xf32>
    %c0_22 = arith.constant 0 : index
    %c0_23 = arith.constant 0 : index
    %37 = vector.load %arg9[%c0_22, %c0_23] : memref<1x512xf32, #tpu.memory_space<vmem>>, vector<1x512xf32>
    %38 = vector.broadcast %37 : vector<1x512xf32> to vector<24x512xf32>
    %39 = arith.addf %36, %38 : vector<24x512xf32>
    %c0_24 = arith.constant 0 : index
    %c0_25 = arith.constant 0 : index
    %40 = vector.load %arg10[%c0_24, %c0_25] : memref<128x256xf32, #tpu.memory_space<vmem>>, vector<128x256xf32>
    %cst_26 = arith.constant dense<0.000000e+00> : vector<24x256xf32>
    %41 = tpu.matmul %32, %40, %cst_26 {dimension_numbers = #tpu.dot_dimension_numbers<[1], [0], [0], [1], [0, 0, 1, 1], [], []>} : vector<24x128xf32>, vector<128x256xf32>, vector<24x256xf32> -> vector<24x256xf32>
    %cst_27 = arith.constant 0.000000e+00 : f32
    %42 = vector.broadcast %cst_27 : f32 to vector<24x128xf32>
    %43 = vector.extract_strided_slice %39 {offsets = [0, 0], sizes = [24, 128], strides = [1, 1]} : vector<24x512xf32> to vector<24x128xf32>
    %44 = vector.extract_strided_slice %39 {offsets = [0, 128], sizes = [24, 128], strides = [1, 1]} : vector<24x512xf32> to vector<24x128xf32>
    %cst_28 = arith.constant dense<0.000000e+00> : vector<24x24xf32>
    %45 = tpu.matmul %43, %44, %cst_28 {dimension_numbers = #tpu.dot_dimension_numbers<[1], [1], [0], [0], [0, 0, 1, 0], [], []>} : vector<24x128xf32>, vector<24x128xf32>, vector<24x24xf32> -> vector<24x24xf32>
    %cst_29 = arith.constant 0.0883883461 : f32
    %46 = vector.broadcast %cst_29 : f32 to vector<24x24xf32>
    %47 = arith.mulf %45, %46 : vector<24x24xf32>
    %cst_30 = arith.constant 0.000000e+00 : f32
    %48 = vector.broadcast %cst_30 : f32 to vector<24x24xf32>
    %49 = arith.cmpf one, %34, %48 : vector<24x24xf32>
    %cst_31 = arith.constant -1.000000e+30 : f32
    %50 = vector.broadcast %cst_31 : f32 to vector<24x24xf32>
    %51 = arith.select %49, %50, %47 : vector<24x24xi1>, vector<24x24xf32>
    %cst_32 = arith.constant dense<0xFF800000> : vector<24xf32>
    %52 = vector.multi_reduction <maximumf>, %51, %cst_32 [1] : vector<24x24xf32> to vector<24xf32>
    %53 = vector.shape_cast %52 : vector<24xf32> to vector<24x1xf32>
    %54 = vector.broadcast %53 : vector<24x1xf32> to vector<24x24xf32>
    %55 = arith.subf %51, %54 : vector<24x24xf32>
    %56 = math.exp %55 : vector<24x24xf32>
    %cst_33 = arith.constant dense<0.000000e+00> : vector<24xf32>
    %57 = vector.multi_reduction <add>, %56, %cst_33 [1] : vector<24x24xf32> to vector<24xf32>
    %58 = vector.shape_cast %57 : vector<24xf32> to vector<24x1xf32>
    %59 = tpu.reciprocal %58 {approx = true} : vector<24x1xf32> -> vector<24x1xf32>
    %60 = vector.broadcast %59 : vector<24x1xf32> to vector<24x24xf32>
    %61 = arith.mulf %56, %60 : vector<24x24xf32>
    %62 = vector.extract_strided_slice %41 {offsets = [0, 0], sizes = [24, 128], strides = [1, 1]} : vector<24x256xf32> to vector<24x128xf32>
    %cst_34 = arith.constant dense<0.000000e+00> : vector<24x128xf32>
    %63 = tpu.matmul %61, %62, %cst_34 {dimension_numbers = #tpu.dot_dimension_numbers<[1], [0], [0], [1], [0, 0, 1, 1], [], []>} : vector<24x24xf32>, vector<24x128xf32>, vector<24x128xf32> -> vector<24x128xf32>
    %64 = vector.shape_cast %63 : vector<24x128xf32> to vector<1x24x128xf32>
    %cst_35 = arith.constant dense<0.000000e+00> : vector<1xf32>
    %65 = vector.multi_reduction <add>, %64, %cst_35 [1, 2] : vector<1x24x128xf32> to vector<1xf32>
    %66 = vector.shape_cast %65 : vector<1xf32> to vector<1x1x1xf32>
    %67 = vector.extract %66[0, 0, 0] : f32 from vector<1x1x1xf32>
    %cst_36 = arith.constant 3.072000e+03 : f32
    %68 = arith.divf %67, %cst_36 : f32
    %69 = arith.mulf %63, %63 : vector<24x128xf32>
    %70 = vector.shape_cast %69 : vector<24x128xf32> to vector<1x24x128xf32>
    %cst_37 = arith.constant dense<0.000000e+00> : vector<1xf32>
    %71 = vector.multi_reduction <add>, %70, %cst_37 [1, 2] : vector<1x24x128xf32> to vector<1xf32>
    %72 = vector.shape_cast %71 : vector<1xf32> to vector<1x1x1xf32>
    %73 = vector.extract %72[0, 0, 0] : f32 from vector<1x1x1xf32>
    %cst_38 = arith.constant 3.072000e+03 : f32
    %74 = arith.divf %73, %cst_38 : f32
    %75 = arith.mulf %68, %68 : f32
    %76 = arith.subf %74, %75 : f32
    %77 = vector.broadcast %68 : f32 to vector<24x128xf32>
    %78 = arith.subf %63, %77 : vector<24x128xf32>
    %cst_39 = arith.constant 9.99999974E-6 : f32
    %79 = arith.addf %76, %cst_39 : f32
    %80 = math.rsqrt %79 : f32
    %81 = vector.broadcast %80 : f32 to vector<24x128xf32>
    %82 = arith.mulf %78, %81 : vector<24x128xf32>
    %c0_40 = arith.constant 0 : index
    %c0_41 = arith.constant 0 : index
    %c0_42 = arith.constant 0 : index
    %83 = vector.load %arg11[%c0_40, %c0_41, %c0_42] : memref<2x24x128xf32, #tpu.memory_space<vmem>>, vector<1x24x128xf32>
    %84 = vector.shape_cast %83 : vector<1x24x128xf32> to vector<24x128xf32>
    %85 = arith.mulf %82, %84 : vector<24x128xf32>
    %c0_43 = arith.constant 0 : index
    %c0_44 = arith.constant 0 : index
    %c0_45 = arith.constant 0 : index
    %86 = vector.load %arg12[%c0_43, %c0_44, %c0_45] : memref<2x24x128xf32, #tpu.memory_space<vmem>>, vector<1x24x128xf32>
    %87 = vector.shape_cast %86 : vector<1x24x128xf32> to vector<24x128xf32>
    %88 = arith.addf %85, %87 : vector<24x128xf32>
    %cst_46 = arith.constant 0.000000e+00 : f32
    %89 = vector.broadcast %cst_46 : f32 to vector<24x128xf32>
    %90 = arith.maximumf %88, %89 : vector<24x128xf32>
    %91 = arith.addf %42, %90 : vector<24x128xf32>
    %92 = vector.extract_strided_slice %39 {offsets = [0, 256], sizes = [24, 128], strides = [1, 1]} : vector<24x512xf32> to vector<24x128xf32>
    %93 = vector.extract_strided_slice %39 {offsets = [0, 384], sizes = [24, 128], strides = [1, 1]} : vector<24x512xf32> to vector<24x128xf32>
    %cst_47 = arith.constant dense<0.000000e+00> : vector<24x24xf32>
    %94 = tpu.matmul %92, %93, %cst_47 {dimension_numbers = #tpu.dot_dimension_numbers<[1], [1], [0], [0], [0, 0, 1, 0], [], []>} : vector<24x128xf32>, vector<24x128xf32>, vector<24x24xf32> -> vector<24x24xf32>
    %cst_48 = arith.constant 0.0883883461 : f32
    %95 = vector.broadcast %cst_48 : f32 to vector<24x24xf32>
    %96 = arith.mulf %94, %95 : vector<24x24xf32>
    %cst_49 = arith.constant 0.000000e+00 : f32
    %97 = vector.broadcast %cst_49 : f32 to vector<24x24xf32>
    %98 = arith.cmpf one, %34, %97 : vector<24x24xf32>
    %cst_50 = arith.constant -1.000000e+30 : f32
    %99 = vector.broadcast %cst_50 : f32 to vector<24x24xf32>
    %100 = arith.select %98, %99, %96 : vector<24x24xi1>, vector<24x24xf32>
    %cst_51 = arith.constant dense<0xFF800000> : vector<24xf32>
    %101 = vector.multi_reduction <maximumf>, %100, %cst_51 [1] : vector<24x24xf32> to vector<24xf32>
    %102 = vector.shape_cast %101 : vector<24xf32> to vector<24x1xf32>
    %103 = vector.broadcast %102 : vector<24x1xf32> to vector<24x24xf32>
    %104 = arith.subf %100, %103 : vector<24x24xf32>
    %105 = math.exp %104 : vector<24x24xf32>
    %cst_52 = arith.constant dense<0.000000e+00> : vector<24xf32>
    %106 = vector.multi_reduction <add>, %105, %cst_52 [1] : vector<24x24xf32> to vector<24xf32>
    %107 = vector.shape_cast %106 : vector<24xf32> to vector<24x1xf32>
    %108 = tpu.reciprocal %107 {approx = true} : vector<24x1xf32> -> vector<24x1xf32>
    %109 = vector.broadcast %108 : vector<24x1xf32> to vector<24x24xf32>
    %110 = arith.mulf %105, %109 : vector<24x24xf32>
    %111 = vector.extract_strided_slice %41 {offsets = [0, 128], sizes = [24, 128], strides = [1, 1]} : vector<24x256xf32> to vector<24x128xf32>
    %cst_53 = arith.constant dense<0.000000e+00> : vector<24x128xf32>
    %112 = tpu.matmul %110, %111, %cst_53 {dimension_numbers = #tpu.dot_dimension_numbers<[1], [0], [0], [1], [0, 0, 1, 1], [], []>} : vector<24x24xf32>, vector<24x128xf32>, vector<24x128xf32> -> vector<24x128xf32>
    %113 = vector.shape_cast %112 : vector<24x128xf32> to vector<1x24x128xf32>
    %cst_54 = arith.constant dense<0.000000e+00> : vector<1xf32>
    %114 = vector.multi_reduction <add>, %113, %cst_54 [1, 2] : vector<1x24x128xf32> to vector<1xf32>
    %115 = vector.shape_cast %114 : vector<1xf32> to vector<1x1x1xf32>
    %116 = vector.extract %115[0, 0, 0] : f32 from vector<1x1x1xf32>
    %cst_55 = arith.constant 3.072000e+03 : f32
    %117 = arith.divf %116, %cst_55 : f32
    %118 = arith.mulf %112, %112 : vector<24x128xf32>
    %119 = vector.shape_cast %118 : vector<24x128xf32> to vector<1x24x128xf32>
    %cst_56 = arith.constant dense<0.000000e+00> : vector<1xf32>
    %120 = vector.multi_reduction <add>, %119, %cst_56 [1, 2] : vector<1x24x128xf32> to vector<1xf32>
    %121 = vector.shape_cast %120 : vector<1xf32> to vector<1x1x1xf32>
    %122 = vector.extract %121[0, 0, 0] : f32 from vector<1x1x1xf32>
    %cst_57 = arith.constant 3.072000e+03 : f32
    %123 = arith.divf %122, %cst_57 : f32
    %124 = arith.mulf %117, %117 : f32
    %125 = arith.subf %123, %124 : f32
    %126 = vector.broadcast %117 : f32 to vector<24x128xf32>
    %127 = arith.subf %112, %126 : vector<24x128xf32>
    %cst_58 = arith.constant 9.99999974E-6 : f32
    %128 = arith.addf %125, %cst_58 : f32
    %129 = math.rsqrt %128 : f32
    %130 = vector.broadcast %129 : f32 to vector<24x128xf32>
    %131 = arith.mulf %127, %130 : vector<24x128xf32>
    %c1 = arith.constant 1 : index
    %c0_59 = arith.constant 0 : index
    %c0_60 = arith.constant 0 : index
    %132 = vector.load %arg11[%c1, %c0_59, %c0_60] : memref<2x24x128xf32, #tpu.memory_space<vmem>>, vector<1x24x128xf32>
    %133 = vector.shape_cast %132 : vector<1x24x128xf32> to vector<24x128xf32>
    %134 = arith.mulf %131, %133 : vector<24x128xf32>
    %c1_61 = arith.constant 1 : index
    %c0_62 = arith.constant 0 : index
    %c0_63 = arith.constant 0 : index
    %135 = vector.load %arg12[%c1_61, %c0_62, %c0_63] : memref<2x24x128xf32, #tpu.memory_space<vmem>>, vector<1x24x128xf32>
    %136 = vector.shape_cast %135 : vector<1x24x128xf32> to vector<24x128xf32>
    %137 = arith.addf %134, %136 : vector<24x128xf32>
    %cst_64 = arith.constant 0.000000e+00 : f32
    %138 = vector.broadcast %cst_64 : f32 to vector<24x128xf32>
    %139 = arith.maximumf %137, %138 : vector<24x128xf32>
    %140 = arith.addf %91, %139 : vector<24x128xf32>
    %c0_65 = arith.constant 0 : index
    %141 = memref.load %arg1[%c0_65] : memref<1xf32, #tpu.memory_space<smem>>
    %142 = vector.broadcast %141 : f32 to vector<24x128xf32>
    %143 = arith.mulf %140, %142 : vector<24x128xf32>
    %144 = arith.addf %32, %143 : vector<24x128xf32>
    %cst_66 = arith.constant 0.000000e+00 : f32
    %145 = vector.broadcast %cst_66 : f32 to vector<12x128xf32>
    %cst_67 = arith.constant 0.000000e+00 : f32
    %146 = vector.broadcast %cst_67 : f32 to vector<1x128xf32>
    %147 = vector.extract_strided_slice %144 {offsets = [0, 0], sizes = [12, 128], strides = [1, 1]} : vector<24x128xf32> to vector<12x128xf32>
    %148 = arith.addf %145, %147 : vector<12x128xf32>
    %cst_68 = arith.constant dense<0xFF800000> : vector<128xf32>
    %149 = vector.multi_reduction <maximumf>, %147, %cst_68 [0] : vector<12x128xf32> to vector<128xf32>
    %150 = vector.shape_cast %149 : vector<128xf32> to vector<1x128xf32>
    %151 = arith.addf %146, %150 : vector<1x128xf32>
    %152 = vector.extract_strided_slice %144 {offsets = [12, 0], sizes = [12, 128], strides = [1, 1]} : vector<24x128xf32> to vector<12x128xf32>
    %153 = arith.addf %148, %152 : vector<12x128xf32>
    %cst_69 = arith.constant dense<0xFF800000> : vector<128xf32>
    %154 = vector.multi_reduction <maximumf>, %152, %cst_69 [0] : vector<12x128xf32> to vector<128xf32>
    %155 = vector.shape_cast %154 : vector<128xf32> to vector<1x128xf32>
    %156 = arith.addf %151, %155 : vector<1x128xf32>
    %cst_70 = arith.constant 5.000000e-01 : f32
    %157 = vector.broadcast %cst_70 : f32 to vector<12x128xf32>
    %158 = arith.mulf %153, %157 : vector<12x128xf32>
    %cst_71 = arith.constant 5.000000e-01 : f32
    %159 = vector.broadcast %cst_71 : f32 to vector<1x128xf32>
    %160 = arith.mulf %156, %159 : vector<1x128xf32>
    %cst_72 = arith.constant 0.000000e+00 : f32
    %161 = vector.broadcast %cst_72 : f32 to vector<3x128xf32>
    %162 = tpu.concatenate %158, %160, %161 in 0 : vector<12x128xf32>, vector<1x128xf32>, vector<3x128xf32> -> vector<16x128xf32>
    %c0_73 = arith.constant 0 : index
    %c0_74 = arith.constant 0 : index
    %163 = vector.load %arg13[%c0_73, %c0_74] : memref<128x128xf32, #tpu.memory_space<vmem>>, vector<128x128xf32>
    %cst_75 = arith.constant dense<0.000000e+00> : vector<16x128xf32>
    %164 = tpu.matmul %162, %163, %cst_75 {dimension_numbers = #tpu.dot_dimension_numbers<[1], [0], [0], [1], [0, 0, 1, 1], [], []>} : vector<16x128xf32>, vector<128x128xf32>, vector<16x128xf32> -> vector<16x128xf32>
    %c0_76 = arith.constant 0 : index
    %c0_77 = arith.constant 0 : index
    %165 = vector.load %arg14[%c0_76, %c0_77] : memref<1x128xf32, #tpu.memory_space<vmem>>, vector<1x128xf32>
    %166 = vector.broadcast %165 : vector<1x128xf32> to vector<16x128xf32>
    %167 = arith.addf %164, %166 : vector<16x128xf32>
    %c0_78 = arith.constant 0 : index
    %c0_79 = arith.constant 0 : index
    %c0_80 = arith.constant 0 : index
    %168 = vector.load %arg15[%c0_78, %c0_79, %c0_80] : memref<1x16x128xf32, #tpu.memory_space<vmem>>, vector<1x16x128xf32>
    %169 = vector.shape_cast %168 : vector<1x16x128xf32> to vector<16x128xf32>
    %170 = vector.shape_cast %167 : vector<16x128xf32> to vector<1x16x128xf32>
    tpu.vector_store %arg15[%c0_78, %c0_79, %c0_80], %170 {strides = array<i32>} : memref<1x16x128xf32, #tpu.memory_space<vmem>>, vector<1x16x128xf32>,
    return
  }
  func.func @transform_0(%arg0: i32) -> i32 {
    %c0_i32 = arith.constant 0 : i32
    %c0_i32_0 = arith.constant 0 : i32
    return %c0_i32 : i32
  }
  func.func @transform_1(%arg0: i32) -> (i32, i32, i32) {
    %c0_i32 = arith.constant 0 : i32
    %c0_i32_0 = arith.constant 0 : i32
    %c0_i32_1 = arith.constant 0 : i32
    return %arg0, %c0_i32, %c0_i32_0 : i32, i32, i32
  }
  func.func @transform_2(%arg0: i32) -> (i32, i32, i32) {
    %c0_i32 = arith.constant 0 : i32
    %c0_i32_0 = arith.constant 0 : i32
    %c0_i32_1 = arith.constant 0 : i32
    return %arg0, %c0_i32, %c0_i32_0 : i32, i32, i32
  }
  func.func @transform_3(%arg0: i32) -> (i32, i32) {
    %c0_i32 = arith.constant 0 : i32
    %c0_i32_0 = arith.constant 0 : i32
    %c0_i32_1 = arith.constant 0 : i32
    return %c0_i32, %c0_i32_0 : i32, i32
  }
  func.func @transform_4(%arg0: i32) -> (i32, i32) {
    %c0_i32 = arith.constant 0 : i32
    %c0_i32_0 = arith.constant 0 : i32
    %c0_i32_1 = arith.constant 0 : i32
    return %c0_i32, %c0_i32_0 : i32, i32
  }
  func.func @transform_5(%arg0: i32) -> (i32, i32) {
    %c0_i32 = arith.constant 0 : i32
    %c0_i32_0 = arith.constant 0 : i32
    %c0_i32_1 = arith.constant 0 : i32
    return %c0_i32, %c0_i32_0 : i32, i32
  }
  func.func @transform_6(%arg0: i32) -> (i32, i32) {
    %c0_i32 = arith.constant 0 : i32
    %c0_i32_0 = arith.constant 0 : i32
    %c0_i32_1 = arith.constant 0 : i32
    return %c0_i32, %c0_i32_0 : i32, i32
  }
  func.func @transform_7(%arg0: i32) -> (i32, i32) {
    %c0_i32 = arith.constant 0 : i32
    %c0_i32_0 = arith.constant 0 : i32
    %c0_i32_1 = arith.constant 0 : i32
    return %c0_i32, %c0_i32_0 : i32, i32
  }
  func.func @transform_8(%arg0: i32) -> (i32, i32) {
    %c0_i32 = arith.constant 0 : i32
    %c0_i32_0 = arith.constant 0 : i32
    %c0_i32_1 = arith.constant 0 : i32
    return %c0_i32, %c0_i32_0 : i32, i32
  }
  func.func @transform_9(%arg0: i32) -> (i32, i32) {
    %c0_i32 = arith.constant 0 : i32
    %c0_i32_0 = arith.constant 0 : i32
    %c0_i32_1 = arith.constant 0 : i32
    return %c0_i32, %c0_i32_0 : i32, i32
  }
  func.func @transform_10(%arg0: i32) -> (i32, i32, i32) {
    %c0_i32 = arith.constant 0 : i32
    %c0_i32_0 = arith.constant 0 : i32
    %c0_i32_1 = arith.constant 0 : i32
    %c0_i32_2 = arith.constant 0 : i32
    return %c0_i32, %c0_i32_0, %c0_i32_1 : i32, i32, i32
  }
  func.func @transform_11(%arg0: i32) -> (i32, i32, i32) {
    %c0_i32 = arith.constant 0 : i32
    %c0_i32_0 = arith.constant 0 : i32
    %c0_i32_1 = arith.constant 0 : i32
    %c0_i32_2 = arith.constant 0 : i32
    return %c0_i32, %c0_i32_0, %c0_i32_1 : i32, i32, i32
  }
  func.func @transform_12(%arg0: i32) -> (i32, i32) {
    %c0_i32 = arith.constant 0 : i32
    %c0_i32_0 = arith.constant 0 : i32
    %c0_i32_1 = arith.constant 0 : i32
    return %c0_i32, %c0_i32_0 : i32, i32
  }
  func.func @transform_13(%arg0: i32) -> (i32, i32) {
    %c0_i32 = arith.constant 0 : i32
    %c0_i32_0 = arith.constant 0 : i32
    %c0_i32_1 = arith.constant 0 : i32
    return %c0_i32, %c0_i32_0 : i32, i32
  }
  func.func @transform_14(%arg0: i32) -> (i32, i32, i32) {
    %c0_i32 = arith.constant 0 : i32
    %c0_i32_0 = arith.constant 0 : i32
    %c0_i32_1 = arith.constant 0 : i32
    return %arg0, %c0_i32, %c0_i32_0 : i32, i32, i32
  }
}

</mosaic_0001>

<llo_original>
// kernel: gcnnet_volleyball_forward.1
$region0: #{gcnnet_volleyball_forward.1}
  #allocation0 [shape = 'u32[]', space=smem, size = 0x4, offset = 0x4, fixed_abs, tag = 'smem constant byte address 0x4 - core index']
  #allocation1 [shape = 'u32[144,128]{1,0:T(1,128)}', space=vmem, size = 0x12000, scoped, tag = 'internal scratch']
  #allocation2 [shape = 'f32[1]{0:T(128)S(6)}', space=smem, size = 0x200, scoped, tag = 'scoped memory for gcnnet_volleyball_forward.1']
  %s0 = inlined_call_operand.<no memory space> [shape: f32[1], index: 0, kind: input, shape index: {}]
  %s1 = inlined_call_operand.vmem [shape: f32[2,24,256], index: 1, kind: input, shape index: {}]
  %s2 = inlined_call_operand.vmem [shape: f32[2,24,24], index: 2, kind: input, shape index: {}]
  %s3 = inlined_call_operand.hbm [shape: f32[256,128], index: 3, kind: input, shape index: {}]
  %s4 = inlined_call_operand.vmem [shape: f32[1,128], index: 4, kind: input, shape index: {}]
  %s5 = inlined_call_operand.vmem [shape: f32[1,128], index: 5, kind: input, shape index: {}]
  %s6 = inlined_call_operand.vmem [shape: f32[1,128], index: 6, kind: input, shape index: {}]
  %s7 = inlined_call_operand.vmem [shape: f32[128,512], index: 7, kind: input, shape index: {}]
  %s8 = inlined_call_operand.vmem [shape: f32[1,512], index: 8, kind: input, shape index: {}]
  %s9 = inlined_call_operand.hbm [shape: f32[128,256], index: 9, kind: input, shape index: {}]
  %s10 = inlined_call_operand.hbm [shape: f32[2,24,128], index: 10, kind: input, shape index: {}]
  %s11 = inlined_call_operand.hbm [shape: f32[2,24,128], index: 11, kind: input, shape index: {}]
  %s12 = inlined_call_operand.vmem [shape: f32[128,128], index: 12, kind: input, shape index: {}]
  %s13 = inlined_call_operand.vmem [shape: f32[1,128], index: 13, kind: input, shape index: {}]
  %s14 = inlined_call_operand.vmem [shape: f32[2,16,128], index: 14, kind: output, shape index: {}]
  %s15 = sld [smem:[#allocation0]]
  $region105: #{gcnnet_volleyball_forward.1} parent=0
    _
  %s17 = ssub.s32 1, %s15
  %s18 = scalar_select 0, %s17, %s15
  %19 = sst [smem:[#allocation2]] %s0
  $region1: #{gcnnet_volleyball_forward.1} parent=0
    #allocation3 [shape = 'u8[131072]{0}', space=vmem, size = 0x20000, scoped, tag = 'input window, operand 3, single buffered']
    #allocation4 [shape = 's32[2]{0}', space=sflag, size = 0x8, scoped, tag = 'scoped memory for gcnnet_volleyball_forward.1']
    #allocation5 [shape = 'u8[131072]{0}', space=vmem, size = 0x20000, scoped, tag = 'input window, operand 9, single buffered']
    #allocation6 [shape = 's32[1]{0}', space=sflag, size = 0x4, scoped, tag = 'scoped memory for gcnnet_volleyball_forward.1']
    #allocation7 [shape = 'u8[24576]{0}', space=vmem, size = 0x6000, scoped, tag = 'input window, operand 10, single buffered']
    #allocation8 [shape = 'u8[24576]{0}', space=vmem, size = 0x6000, scoped, tag = 'input window, operand 11, single buffered']
    #allocation9 [shape = 's32[1]{0}', space=sflag, size = 0x4, scoped, tag = 'scoped memory for gcnnet_volleyball_forward.1']
    %20 = vsyncpa [#allocation4], 0
    %21 = vsyncpa [#allocation6], 0
    %22 = vsyncpa [#allocation9], 0
    loop: start=0, step=1, limit=4
    $region2: #{gcnnet_volleyball_forward.1} parent=1 // loop_pre_header
      _
    $region3: #{gcnnet_volleyball_forward.1} parent=1 // loop_header
      %s24 = sphi 0, %s28
      %p25 = scmp.ge.s32.totalorder %s24, 4
      %s32 = sphi 0, %s32
      %s34 = sphi 0, %s32
      %s35 = sphi 0, %s34
      %s49 = sphi 0, %s35
      %s55 = sphi 0, %s57
      %s58 = sphi 0, %s55
      %s59 = sphi 0, %s58
      %s75 = sphi 0, %s59
      %s81 = sphi 0, %s83
      %s84 = sphi 0, %s81
      %s85 = sphi 0, %s84
      %s101 = sphi 0, %s85
      %s105 = sphi 0, %s105
      %s107 = sphi 0, %s105
      %s108 = sphi 0, %s107
      %s122 = sphi 0, %s108
      %s126 = sphi 0, %s126
      %s128 = sphi 0, %s126
      %s129 = sphi 0, %s128
      %s143 = sphi 0, %s129
      %s147 = sphi 0, %s147
      %s149 = sphi 0, %s147
      %s150 = sphi 0, %s149
      %s164 = sphi 0, %s150
      %s168 = sphi 0, %s168
      %s170 = sphi 0, %s168
      %s171 = sphi 0, %s170
      %s185 = sphi 0, %s171
      %s189 = sphi 0, %s189
      %s191 = sphi 0, %s189
      %s192 = sphi 0, %s191
      %s206 = sphi 0, %s192
      %s210 = sphi 0, %s210
      %s212 = sphi 0, %s210
      %s213 = sphi 0, %s212
      %s227 = sphi 0, %s213
      %s231 = sphi 0, %s231
      %s233 = sphi 0, %s231
      %s234 = sphi 0, %s233
      %s248 = sphi 0, %s234
      %s252 = sphi 0, %s252
      %s254 = sphi 0, %s252
      %s255 = sphi 0, %s254
      %s269 = sphi 0, %s255
      %s273 = sphi 0, %s273
      %s275 = sphi 0, %s273
      %s276 = sphi 0, %s275
      %s290 = sphi 0, %s276
      %s294 = sphi 0, %s294
      %s296 = sphi 0, %s294
      %s297 = sphi 0, %s296
      %s311 = sphi 0, %s297
      %s315 = sphi 0, %s315
      %s317 = sphi 0, %s315
      %s318 = sphi 0, %s317
      %s332 = sphi 0, %s318
      %s338 = sphi 0, %s340
      %s341 = sphi 0, %s338
      %s342 = sphi 0, %s341
      %s358 = sphi 0, %s342
    $region4: #{gcnnet_volleyball_forward.1} parent=1 // loop_header_branch
      %27 = sbr.rel (%p25) target = $region8
    $region5: #{gcnnet_volleyball_forward.1} parent=1 // loop_body
      %s29 = ssub.s32 %s24, 1
      %s30 = ssub.s32 %s24, 2
      %s31 = sadd.s32 %s24, 1
      %s33 = sadd.s32 %s32, 1
      %p36 = scmp.eq.s32.totalorder %s24, 1
      %p37 = scmp.ne.s32.totalorder %s32, %s34
      %p38 = scmp.eq.s32.totalorder %s24, 0
      %p39 = por %p37, %p38
      %p40 = scmp.ne.s32.totalorder %s32, %s34
      %p41 = scmp.eq.s32.totalorder %s29, 1
      %p42 = por %p40, %p41
      %p43 = scmp.ne.s32.totalorder %s34, %s35
      %p44 = scmp.eq.s32.totalorder %s29, 0
      %p45 = por %p43, %p44
      %p46 = scmp.ne.s32.totalorder %s34, %s35
      %p47 = scmp.eq.s32.totalorder %s30, 1
      %p48 = por %p46, %p47
      %p50 = scmp.ne.s32.totalorder %s35, %s49
      %p51 = scmp.eq.s32.totalorder %s30, 0
      %p52 = por %p50, %p51
      %s53 = ssub.s32 %s24, %s31
      %p54 = scmp.eq.s32.totalorder %s53, 0
      %s56 = sadd.s32 %s55, 1
      %s57 = scalar_select %p54, %s55, %s56
      %p60 = pneg %p54
      %p61 = scmp.eq.s32.totalorder %s24, 1
      %p62 = por %p60, %p61
      %p63 = scmp.ne.s32.totalorder %s55, %s58
      %p64 = scmp.eq.s32.totalorder %s24, 0
      %p65 = por %p63, %p64
      %p66 = scmp.ne.s32.totalorder %s55, %s58
      %p67 = scmp.eq.s32.totalorder %s29, 1
      %p68 = por %p66, %p67
      %p69 = scmp.ne.s32.totalorder %s58, %s59
      %p70 = scmp.eq.s32.totalorder %s29, 0
      %p71 = por %p69, %p70
      %p72 = scmp.ne.s32.totalorder %s58, %s59
      %p73 = scmp.eq.s32.totalorder %s30, 1
      %p74 = por %p72, %p73
      %p76 = scmp.ne.s32.totalorder %s59, %s75
      %p77 = scmp.eq.s32.totalorder %s30, 0
      %p78 = por %p76, %p77
      %s79 = ssub.s32 %s24, %s31
      %p80 = scmp.eq.s32.totalorder %s79, 0
      %s82 = sadd.s32 %s81, 1
      %s83 = scalar_select %p80, %s81, %s82
      %p86 = pneg %p80
      %p87 = scmp.eq.s32.totalorder %s24, 1
      %p88 = por %p86, %p87
      %p89 = scmp.ne.s32.totalorder %s81, %s84
      %p90 = scmp.eq.s32.totalorder %s24, 0
      %p91 = por %p89, %p90
      %p92 = scmp.ne.s32.totalorder %s81, %s84
      %p93 = scmp.eq.s32.totalorder %s29, 1
      %p94 = por %p92, %p93
      %p95 = scmp.ne.s32.totalorder %s84, %s85
      %p96 = scmp.eq.s32.totalorder %s29, 0
      %p97 = por %p95, %p96
      %p98 = scmp.ne.s32.totalorder %s84, %s85
      %p99 = scmp.eq.s32.totalorder %s30, 1
      %p100 = por %p98, %p99
      %p102 = scmp.ne.s32.totalorder %s85, %s101
      %p103 = scmp.eq.s32.totalorder %s30, 0
      %p104 = por %p102, %p103
      %s106 = sadd.s32 %s105, 1
      %p109 = scmp.eq.s32.totalorder %s24, 1
      %p110 = scmp.ne.s32.totalorder %s105, %s107
      %p111 = scmp.eq.s32.totalorder %s24, 0
      %p112 = por %p110, %p111
      %p113 = scmp.ne.s32.totalorder %s105, %s107
      %p114 = scmp.eq.s32.totalorder %s29, 1
      %p115 = por %p113, %p114
      %p116 = scmp.ne.s32.totalorder %s107, %s108
      %p117 = scmp.eq.s32.totalorder %s29, 0
      %p118 = por %p116, %p117
      %p119 = scmp.ne.s32.totalorder %s107, %s108
      %p120 = scmp.eq.s32.totalorder %s30, 1
      %p121 = por %p119, %p120
      %p123 = scmp.ne.s32.totalorder %s108, %s122
      %p124 = scmp.eq.s32.totalorder %s30, 0
      %p125 = por %p123, %p124
      %s127 = sadd.s32 %s126, 1
      %p130 = scmp.eq.s32.totalorder %s24, 1
      %p131 = scmp.ne.s32.totalorder %s126, %s128
      %p132 = scmp.eq.s32.totalorder %s24, 0
      %p133 = por %p131, %p132
      %p134 = scmp.ne.s32.totalorder %s126, %s128
      %p135 = scmp.eq.s32.totalorder %s29, 1
      %p136 = por %p134, %p135
      %p137 = scmp.ne.s32.totalorder %s128, %s129
      %p138 = scmp.eq.s32.totalorder %s29, 0
      %p139 = por %p137, %p138
      %p140 = scmp.ne.s32.totalorder %s128, %s129
      %p141 = scmp.eq.s32.totalorder %s30, 1
      %p142 = por %p140, %p141
      %p144 = scmp.ne.s32.totalorder %s129, %s143
      %p145 = scmp.eq.s32.totalorder %s30, 0
      %p146 = por %p144, %p145
      %s148 = sadd.s32 %s147, 1
      %p151 = scmp.eq.s32.totalorder %s24, 1
      %p152 = scmp.ne.s32.totalorder %s147, %s149
      %p153 = scmp.eq.s32.totalorder %s24, 0
      %p154 = por %p152, %p153
      %p155 = scmp.ne.s32.totalorder %s147, %s149
      %p156 = scmp.eq.s32.totalorder %s29, 1
      %p157 = por %p155, %p156
      %p158 = scmp.ne.s32.totalorder %s149, %s150
      %p159 = scmp.eq.s32.totalorder %s29, 0
      %p160 = por %p158, %p159
      %p161 = scmp.ne.s32.totalorder %s149, %s150
      %p162 = scmp.eq.s32.totalorder %s30, 1
      %p163 = por %p161, %p162
      %p165 = scmp.ne.s32.totalorder %s150, %s164
      %p166 = scmp.eq.s32.totalorder %s30, 0
      %p167 = por %p165, %p166
      %s169 = sadd.s32 %s168, 1
      %p172 = scmp.eq.s32.totalorder %s24, 1
      %p173 = scmp.ne.s32.totalorder %s168, %s170
      %p174 = scmp.eq.s32.totalorder %s24, 0
      %p175 = por %p173, %p174
      %p176 = scmp.ne.s32.totalorder %s168, %s170
      %p177 = scmp.eq.s32.totalorder %s29, 1
      %p178 = por %p176, %p177
      %p179 = scmp.ne.s32.totalorder %s170, %s171
      %p180 = scmp.eq.s32.totalorder %s29, 0
      %p181 = por %p179, %p180
      %p182 = scmp.ne.s32.totalorder %s170, %s171
      %p183 = scmp.eq.s32.totalorder %s30, 1
      %p184 = por %p182, %p183
      %p186 = scmp.ne.s32.totalorder %s171, %s185
      %p187 = scmp.eq.s32.totalorder %s30, 0
      %p188 = por %p186, %p187
      %s190 = sadd.s32 %s189, 1
      %p193 = scmp.eq.s32.totalorder %s24, 1
      %p194 = scmp.ne.s32.totalorder %s189, %s191
      %p195 = scmp.eq.s32.totalorder %s24, 0
      %p196 = por %p194, %p195
      %p197 = scmp.ne.s32.totalorder %s189, %s191
      %p198 = scmp.eq.s32.totalorder %s29, 1
      %p199 = por %p197, %p198
      %p200 = scmp.ne.s32.totalorder %s191, %s192
      %p201 = scmp.eq.s32.totalorder %s29, 0
      %p202 = por %p200, %p201
      %p203 = scmp.ne.s32.totalorder %s191, %s192
      %p204 = scmp.eq.s32.totalorder %s30, 1
      %p205 = por %p203, %p204
      %p207 = scmp.ne.s32.totalorder %s192, %s206
      %p208 = scmp.eq.s32.totalorder %s30, 0
      %p209 = por %p207, %p208
      %s211 = sadd.s32 %s210, 1
      %p214 = scmp.eq.s32.totalorder %s24, 1
      %p215 = scmp.ne.s32.totalorder %s210, %s212
      %p216 = scmp.eq.s32.totalorder %s24, 0
      %p217 = por %p215, %p216
      %p218 = scmp.ne.s32.totalorder %s210, %s212
      %p219 = scmp.eq.s32.totalorder %s29, 1
      %p220 = por %p218, %p219
      %p221 = scmp.ne.s32.totalorder %s212, %s213
      %p222 = scmp.eq.s32.totalorder %s29, 0
      %p223 = por %p221, %p222
      %p224 = scmp.ne.s32.totalorder %s212, %s213
      %p225 = scmp.eq.s32.totalorder %s30, 1
      %p226 = por %p224, %p225
      %p228 = scmp.ne.s32.totalorder %s213, %s227
      %p229 = scmp.eq.s32.totalorder %s30, 0
      %p230 = por %p228, %p229
      %s232 = sadd.s32 %s231, 1
      %p235 = scmp.eq.s32.totalorder %s24, 1
      %p236 = scmp.ne.s32.totalorder %s231, %s233
      %p237 = scmp.eq.s32.totalorder %s24, 0
      %p238 = por %p236, %p237
      %p239 = scmp.ne.s32.totalorder %s231, %s233
      %p240 = scmp.eq.s32.totalorder %s29, 1
      %p241 = por %p239, %p240
      %p242 = scmp.ne.s32.totalorder %s233, %s234
      %p243 = scmp.eq.s32.totalorder %s29, 0
      %p244 = por %p242, %p243
      %p245 = scmp.ne.s32.totalorder %s233, %s234
      %p246 = scmp.eq.s32.totalorder %s30, 1
      %p247 = por %p245, %p246
      %p249 = scmp.ne.s32.totalorder %s234, %s248
      %p250 = scmp.eq.s32.totalorder %s30, 0
      %p251 = por %p249, %p250
      %s253 = sadd.s32 %s252, 1
      %p256 = scmp.eq.s32.totalorder %s24, 1
      %p257 = scmp.ne.s32.totalorder %s252, %s254
      %p258 = scmp.eq.s32.totalorder %s24, 0
      %p259 = por %p257, %p258
      %p260 = scmp.ne.s32.totalorder %s252, %s254
      %p261 = scmp.eq.s32.totalorder %s29, 1
      %p262 = por %p260, %p261
      %p263 = scmp.ne.s32.totalorder %s254, %s255
      %p264 = scmp.eq.s32.totalorder %s29, 0
      %p265 = por %p263, %p264
      %p266 = scmp.ne.s32.totalorder %s254, %s255
      %p267 = scmp.eq.s32.totalorder %s30, 1
      %p268 = por %p266, %p267
      %p270 = scmp.ne.s32.totalorder %s255, %s269
      %p271 = scmp.eq.s32.totalorder %s30, 0
      %p272 = por %p270, %p271
      %s274 = sadd.s32 %s273, 1
      %p277 = scmp.eq.s32.totalorder %s24, 1
      %p278 = scmp.ne.s32.totalorder %s273, %s275
      %p279 = scmp.eq.s32.totalorder %s24, 0
      %p280 = por %p278, %p279
      %p281 = scmp.ne.s32.totalorder %s273, %s275
      %p282 = scmp.eq.s32.totalorder %s29, 1
      %p283 = por %p281, %p282
      %p284 = scmp.ne.s32.totalorder %s275, %s276
      %p285 = scmp.eq.s32.totalorder %s29, 0
      %p286 = por %p284, %p285
      %p287 = scmp.ne.s32.totalorder %s275, %s276
      %p288 = scmp.eq.s32.totalorder %s30, 1
      %p289 = por %p287, %p288
      %p291 = scmp.ne.s32.totalorder %s276, %s290
      %p292 = scmp.eq.s32.totalorder %s30, 0
      %p293 = por %p291, %p292
      %s295 = sadd.s32 %s294, 1
      %p298 = scmp.eq.s32.totalorder %s24, 1
      %p299 = scmp.ne.s32.totalorder %s294, %s296
      %p300 = scmp.eq.s32.totalorder %s24, 0
      %p301 = por %p299, %p300
      %p302 = scmp.ne.s32.totalorder %s294, %s296
      %p303 = scmp.eq.s32.totalorder %s29, 1
      %p304 = por %p302, %p303
      %p305 = scmp.ne.s32.totalorder %s296, %s297
      %p306 = scmp.eq.s32.totalorder %s29, 0
      %p307 = por %p305, %p306
      %p308 = scmp.ne.s32.totalorder %s296, %s297
      %p309 = scmp.eq.s32.totalorder %s30, 1
      %p310 = por %p308, %p309
      %p312 = scmp.ne.s32.totalorder %s297, %s311
      %p313 = scmp.eq.s32.totalorder %s30, 0
      %p314 = por %p312, %p313
      %s316 = sadd.s32 %s315, 1
      %p319 = scmp.eq.s32.totalorder %s24, 1
      %p320 = scmp.ne.s32.totalorder %s315, %s317
      %p321 = scmp.eq.s32.totalorder %s24, 0
      %p322 = por %p320, %p321
      %p323 = scmp.ne.s32.totalorder %s315, %s317
      %p324 = scmp.eq.s32.totalorder %s29, 1
      %p325 = por %p323, %p324
      %p326 = scmp.ne.s32.totalorder %s317, %s318
      %p327 = scmp.eq.s32.totalorder %s29, 0
      %p328 = por %p326, %p327
      %p329 = scmp.ne.s32.totalorder %s317, %s318
      %p330 = scmp.eq.s32.totalorder %s30, 1
      %p331 = por %p329, %p330
      %p333 = scmp.ne.s32.totalorder %s318, %s332
      %p334 = scmp.eq.s32.totalorder %s30, 0
      %p335 = por %p333, %p334
      %s336 = ssub.s32 %s24, %s31
      %p337 = scmp.eq.s32.totalorder %s336, 0
      %s339 = sadd.s32 %s338, 1
      %s340 = scalar_select %p337, %s338, %s339
      %p343 = pneg %p337
      %p344 = scmp.eq.s32.totalorder %s24, 1
      %p345 = por %p343, %p344
      %p346 = scmp.ne.s32.totalorder %s338, %s341
      %p347 = scmp.eq.s32.totalorder %s24, 0
      %p348 = por %p346, %p347
      %p349 = scmp.ne.s32.totalorder %s338, %s341
      %p350 = scmp.eq.s32.totalorder %s29, 1
      %p351 = por %p349, %p350
      %p352 = scmp.ne.s32.totalorder %s341, %s342
      %p353 = scmp.eq.s32.totalorder %s29, 0
      %p354 = por %p352, %p353
      %p355 = scmp.ne.s32.totalorder %s341, %s342
      %p356 = scmp.eq.s32.totalorder %s30, 1
      %p357 = por %p355, %p356
      %p359 = scmp.ne.s32.totalorder %s342, %s358
      %p360 = scmp.eq.s32.totalorder %s30, 0
      %p361 = por %p359, %p360
      %p362 = scmp.le.s32.totalorder 1, %s24
      %p363 = scmp.lt.s32.totalorder %s24, 3
      %p364 = pnand %p362, %p363
      %p365 = pneg %p364
      // Predicated region
      $region9: #{gcnnet_volleyball_forward.1} parent=5 // pred_check
        _
      $region10: #{gcnnet_volleyball_forward.1} parent=5 // pred_check_branch
        %367 = sbr.rel (%p364) target = $region12
      $region11: #{gcnnet_volleyball_forward.1} parent=5 // pred_region
        %s368 = ssub.s32 %s24, 1
        // Predicated region
        $region13: #{gcnnet_volleyball_forward.1} parent=11 // pred_check
          %p369 = pneg %p45
        $region14: #{gcnnet_volleyball_forward.1} parent=11 // pred_check_branch
          %371 = sbr.rel (%p369) target = $region16
        $region15: #{gcnnet_volleyball_forward.1} parent=11 // pred_region
          _
        $region16: #{gcnnet_volleyball_forward.1} parent=11 // pred_fallthru
          _
        // Predicated region
        $region17: #{gcnnet_volleyball_forward.1} parent=11 // pred_check
          %p372 = pneg %p118
        $region18: #{gcnnet_volleyball_forward.1} parent=11 // pred_check_branch
          %374 = sbr.rel (%p372) target = $region20
        $region19: #{gcnnet_volleyball_forward.1} parent=11 // pred_region
          %s376 = ssub.s32 4096, 4096
          %377 = vsyncadd [#allocation4], %s376
          %s378 = sshll.u32 [#allocation3], 4
          %s379 = int_to_ptr.vmem [resolvable:$true] %s378
          %384 = dma.hbm_to_vmem [thread:$0]  %s3, 4096, %s379, [#allocation4], 128, 128, 8
        $region20: #{gcnnet_volleyball_forward.1} parent=11 // pred_fallthru
          _
        // Predicated region
        $region21: #{gcnnet_volleyball_forward.1} parent=11 // pred_check
          %p385 = pneg %p139
        $region22: #{gcnnet_volleyball_forward.1} parent=11 // pred_check_branch
          %387 = sbr.rel (%p385) target = $region24
        $region23: #{gcnnet_volleyball_forward.1} parent=11 // pred_region
          _
        $region24: #{gcnnet_volleyball_forward.1} parent=11 // pred_fallthru
          _
        // Predicated region
        $region25: #{gcnnet_volleyball_forward.1} parent=11 // pred_check
          %p388 = pneg %p160
        $region26: #{gcnnet_volleyball_forward.1} parent=11 // pred_check_branch
          %390 = sbr.rel (%p388) target = $region28
        $region27: #{gcnnet_volleyball_forward.1} parent=11 // pred_region
          _
        $region28: #{gcnnet_volleyball_forward.1} parent=11 // pred_fallthru
          _
        // Predicated region
        $region29: #{gcnnet_volleyball_forward.1} parent=11 // pred_check
          %p391 = pneg %p181
        $region30: #{gcnnet_volleyball_forward.1} parent=11 // pred_check_branch
          %393 = sbr.rel (%p391) target = $region32
        $region31: #{gcnnet_volleyball_forward.1} parent=11 // pred_region
          _
        $region32: #{gcnnet_volleyball_forward.1} parent=11 // pred_fallthru
          _
        // Predicated region
        $region33: #{gcnnet_volleyball_forward.1} parent=11 // pred_check
          %p394 = pneg %p202
        $region34: #{gcnnet_volleyball_forward.1} parent=11 // pred_check_branch
          %396 = sbr.rel (%p394) target = $region36
        $region35: #{gcnnet_volleyball_forward.1} parent=11 // pred_region
          _
        $region36: #{gcnnet_volleyball_forward.1} parent=11 // pred_fallthru
          _
        // Predicated region
        $region37: #{gcnnet_volleyball_forward.1} parent=11 // pred_check
          %p397 = pneg %p223
        $region38: #{gcnnet_volleyball_forward.1} parent=11 // pred_check_branch
          %399 = sbr.rel (%p397) target = $region40
        $region39: #{gcnnet_volleyball_forward.1} parent=11 // pred_region
          _
        $region40: #{gcnnet_volleyball_forward.1} parent=11 // pred_fallthru
          _
        // Predicated region
        $region41: #{gcnnet_volleyball_forward.1} parent=11 // pred_check
          %p400 = pneg %p244
        $region42: #{gcnnet_volleyball_forward.1} parent=11 // pred_check_branch
          %402 = sbr.rel (%p400) target = $region44
        $region43: #{gcnnet_volleyball_forward.1} parent=11 // pred_region
          %s404 = ssub.s32 4096, 4096
          %405 = vsyncadd [#allocation6], %s404
          %s406 = sshll.u32 [#allocation5], 4
          %s407 = int_to_ptr.vmem [resolvable:$true] %s406
          %412 = dma.hbm_to_vmem [thread:$0]  %s9, 4096, %s407, [#allocation6], 256, 256, 16
        $region44: #{gcnnet_volleyball_forward.1} parent=11 // pred_fallthru
          _
        // Predicated region
        $region45: #{gcnnet_volleyball_forward.1} parent=11 // pred_check
          %p413 = pneg %p265
        $region46: #{gcnnet_volleyball_forward.1} parent=11 // pred_check_branch
          %415 = sbr.rel (%p413) target = $region48
        $region47: #{gcnnet_volleyball_forward.1} parent=11 // pred_region
          %s417 = ssub.s32 768, 768
          %418 = vsyncadd [#allocation6], %s417
          %s419 = sshll.u32 [#allocation7], 4
          %s420 = int_to_ptr.vmem [resolvable:$true] %s419
          %425 = dma.hbm_to_vmem [thread:$0]  %s10, 768, %s420, [#allocation6], 128, 128, 8
        $region48: #{gcnnet_volleyball_forward.1} parent=11 // pred_fallthru
          _
        // Predicated region
        $region49: #{gcnnet_volleyball_forward.1} parent=11 // pred_check
          %p426 = pneg %p286
        $region50: #{gcnnet_volleyball_forward.1} parent=11 // pred_check_branch
          %428 = sbr.rel (%p426) target = $region52
        $region51: #{gcnnet_volleyball_forward.1} parent=11 // pred_region
          %s430 = ssub.s32 768, 768
          %431 = vsyncadd [#allocation9], %s430
          %s432 = sshll.u32 [#allocation8], 4
          %s433 = int_to_ptr.vmem [resolvable:$true] %s432
          %438 = dma.hbm_to_vmem [thread:$0]  %s11, 768, %s433, [#allocation9], 128, 128, 8
        $region52: #{gcnnet_volleyball_forward.1} parent=11 // pred_fallthru
          _
        // Predicated region
        $region53: #{gcnnet_volleyball_forward.1} parent=11 // pred_check
          %p439 = pneg %p307
        $region54: #{gcnnet_volleyball_forward.1} parent=11 // pred_check_branch
          %441 = sbr.rel (%p439) target = $region56
        $region55: #{gcnnet_volleyball_forward.1} parent=11 // pred_region
          _
        $region56: #{gcnnet_volleyball_forward.1} parent=11 // pred_fallthru
          _
        // Predicated region
        $region57: #{gcnnet_volleyball_forward.1} parent=11 // pred_check
          %p442 = pneg %p328
        $region58: #{gcnnet_volleyball_forward.1} parent=11 // pred_check_branch
          %444 = sbr.rel (%p442) target = $region60
        $region59: #{gcnnet_volleyball_forward.1} parent=11 // pred_region
          _
        $region60: #{gcnnet_volleyball_forward.1} parent=11 // pred_fallthru
          _
      $region12: #{gcnnet_volleyball_forward.1} parent=5 // pred_fallthru
        _
      %p445 = scmp.lt.s32.totalorder %s24, 2
      // Predicated region
      $region61: #{gcnnet_volleyball_forward.1} parent=5 // pred_check
        %p446 = pneg %p445
      $region62: #{gcnnet_volleyball_forward.1} parent=5 // pred_check_branch
        %448 = sbr.rel (%p446) target = $region64
      $region63: #{gcnnet_volleyball_forward.1} parent=5 // pred_region
        // Predicated region
        $region65: #{gcnnet_volleyball_forward.1} parent=63 // pred_check
          %p449 = pneg %p65
        $region66: #{gcnnet_volleyball_forward.1} parent=63 // pred_check_branch
          %451 = sbr.rel (%p449) target = $region68
        $region67: #{gcnnet_volleyball_forward.1} parent=63 // pred_region
          %p452 = scmp.lt.s32.totalorder %s24, 1
          %s453 = scalar_select %p452, %s24, 1
          %s454 = smul.addr %s453, 6
          %s455 = smul.addr %s454, 8
          %s456 = scalar_lea.vmem %s1, %s455
        $region68: #{gcnnet_volleyball_forward.1} parent=63 // pred_fallthru
          _
        // Predicated region
        $region69: #{gcnnet_volleyball_forward.1} parent=63 // pred_check
          %p457 = pneg %p91
        $region70: #{gcnnet_volleyball_forward.1} parent=63 // pred_check_branch
          %459 = sbr.rel (%p457) target = $region72
        $region71: #{gcnnet_volleyball_forward.1} parent=63 // pred_region
          %p460 = scmp.lt.s32.totalorder %s24, 1
          %s461 = scalar_select %p460, %s24, 1
          %s462 = smul.addr %s461, 3
          %s463 = smul.addr %s462, 8
          %s464 = scalar_lea.vmem %s2, %s463
        $region72: #{gcnnet_volleyball_forward.1} parent=63 // pred_fallthru
          _
      $region64: #{gcnnet_volleyball_forward.1} parent=5 // pred_fallthru
        _
      %p465 = scmp.le.s32.totalorder 1, %s24
      %p466 = scmp.lt.s32.totalorder %s24, 3
      %p467 = pnand %p465, %p466
      %p468 = pneg %p467
      // Predicated region
      $region73: #{gcnnet_volleyball_forward.1} parent=5 // pred_check
        _
      $region74: #{gcnnet_volleyball_forward.1} parent=5 // pred_check_branch
        %470 = sbr.rel (%p467) target = $region76
      $region75: #{gcnnet_volleyball_forward.1} parent=5 // pred_region
        %s471 = ssub.s32 %s24, 1
        // Predicated region
        $region77: #{gcnnet_volleyball_forward.1} parent=75 // pred_check
          %p472 = pneg %p118
        $region78: #{gcnnet_volleyball_forward.1} parent=75 // pred_check_branch
          %474 = sbr.rel (%p472) target = $region80
        $region79: #{gcnnet_volleyball_forward.1} parent=75 // pred_region
          %475 = dma.done [#allocation4], 4096
        $region80: #{gcnnet_volleyball_forward.1} parent=75 // pred_fallthru
          _
        // Predicated region
        $region81: #{gcnnet_volleyball_forward.1} parent=75 // pred_check
          %p476 = pneg %p244
        $region82: #{gcnnet_volleyball_forward.1} parent=75 // pred_check_branch
          %478 = sbr.rel (%p476) target = $region84
        $region83: #{gcnnet_volleyball_forward.1} parent=75 // pred_region
          %479 = dma.done [#allocation6], 4096
        $region84: #{gcnnet_volleyball_forward.1} parent=75 // pred_fallthru
          _
        // Predicated region
        $region85: #{gcnnet_volleyball_forward.1} parent=75 // pred_check
          %p480 = pneg %p265
        $region86: #{gcnnet_volleyball_forward.1} parent=75 // pred_check_branch
          %482 = sbr.rel (%p480) target = $region88
        $region87: #{gcnnet_volleyball_forward.1} parent=75 // pred_region
          %483 = dma.done [#allocation6], 768
        $region88: #{gcnnet_volleyball_forward.1} parent=75 // pred_fallthru
          _
        // Predicated region
        $region89: #{gcnnet_volleyball_forward.1} parent=75 // pred_check
          %p484 = pneg %p286
        $region90: #{gcnnet_volleyball_forward.1} parent=75 // pred_check_branch
          %486 = sbr.rel (%p484) target = $region92
        $region91: #{gcnnet_volleyball_forward.1} parent=75 // pred_region
          %487 = dma.done [#allocation9], 768
        $region92: #{gcnnet_volleyball_forward.1} parent=75 // pred_fallthru
          _
        %p488 = pneg %p45
        %p489 = pneg %p42
        %p490 = scmp.lt.s32.totalorder %s29, 1
        %s491 = scalar_select %p490, %s29, 1
        %s492 = smul.addr %s491, 6
        %s493 = smul.addr %s492, 8
        %s494 = scalar_lea.vmem %s1, %s493
        %p495 = pneg %p71
        %p496 = pneg %p68
        %p497 = scmp.lt.s32.totalorder %s29, 1
        %s498 = scalar_select %p497, %s29, 1
        %s499 = smul.addr %s498, 3
        %s500 = smul.addr %s499, 8
        %s501 = scalar_lea.vmem %s2, %s500
        %p502 = pneg %p97
        %p503 = pneg %p94
        %p504 = pneg %p118
        %p505 = pneg %p115
        %p506 = pneg %p139
        %p507 = pneg %p136
        %p508 = pneg %p160
        %p509 = pneg %p157
        %p510 = pneg %p181
        %p511 = pneg %p178
        %p512 = pneg %p202
        %p513 = pneg %p199
        %p514 = pneg %p223
        %p515 = pneg %p220
        %p516 = pneg %p244
        %p517 = pneg %p241
        %p518 = pneg %p265
        %p519 = pneg %p262
        %p520 = pneg %p286
        %p521 = pneg %p283
        %p522 = pneg %p307
        %p523 = pneg %p304
        %p524 = pneg %p328
        %p525 = pneg %p325
        %p526 = pneg %p354
        %p527 = pneg %p351
        %p528 = scmp.lt.s32.totalorder %s29, 1
        %s529 = scalar_select %p528, %s29, 1
        %s530 = smul.addr %s529, 2
        %s531 = smul.addr %s530, 8
        %s532 = scalar_lea.vmem %s14, %s531
        %p533 = scmp.lt.s32.totalorder %s29, 1
        %s534 = scalar_select %p533, %s29, 1
        %s535 = smul.addr %s534, 6
        %s536 = smul.addr %s535, 8
        %s537 = scalar_lea.vmem %s1, %s536
        %p538 = scmp.lt.s32.totalorder %s29, 1
        %s539 = scalar_select %p538, %s29, 1
        %s540 = smul.addr %s539, 3
        %s541 = smul.addr %s540, 8
        %s542 = scalar_lea.vmem %s2, %s541
        %p543 = scmp.lt.s32.totalorder %s29, 1
        %s544 = scalar_select %p543, %s29, 1
        %s545 = smul.addr %s544, 2
        %s546 = smul.addr %s545, 8
        %s547 = scalar_lea.vmem %s14, %s546
        %v548 = vld [vmem:[%s537] sm:$0xff]
        %v549 = vld [vmem:[%s537 + $0x8] sm:$0xff]
        %v550 = vld [vmem:[%s537 + $0x10] sm:$0xff]
        %v551 = vld [vmem:[%s537 + $0x18] sm:$0xff]
        %v552 = vld [vmem:[%s537 + $0x20] sm:$0xff]
        %v553 = vld [vmem:[%s537 + $0x28] sm:$0xff]
        %v554 = vld [vmem:[#allocation3] sm:$0xff]
        %v555 = vld [vmem:[#allocation3 + $0x8] sm:$0xff]
        %v556 = vld [vmem:[#allocation3 + $0x10] sm:$0xff]
        %v557 = vld [vmem:[#allocation3 + $0x18] sm:$0xff]
        %v558 = vld [vmem:[#allocation3 + $0x20] sm:$0xff]
        %v559 = vld [vmem:[#allocation3 + $0x28] sm:$0xff]
        %v560 = vld [vmem:[#allocation3 + $0x30] sm:$0xff]
        %v561 = vld [vmem:[#allocation3 + $0x38] sm:$0xff]
        %v562 = vld [vmem:[#allocation3 + $0x40] sm:$0xff]
        %v563 = vld [vmem:[#allocation3 + $0x48] sm:$0xff]
        %v564 = vld [vmem:[#allocation3 + $0x50] sm:$0xff]
        %v565 = vld [vmem:[#allocation3 + $0x58] sm:$0xff]
        %v566 = vld [vmem:[#allocation3 + $0x60] sm:$0xff]
        %v567 = vld [vmem:[#allocation3 + $0x68] sm:$0xff]
        %v568 = vld [vmem:[#allocation3 + $0x70] sm:$0xff]
        %v569 = vld [vmem:[#allocation3 + $0x78] sm:$0xff]
        %v570 = vld [vmem:[#allocation3 + $0x80] sm:$0xff]
        %v571 = vld [vmem:[#allocation3 + $0x88] sm:$0xff]
        %v572 = vld [vmem:[#allocation3 + $0x90] sm:$0xff]
        %v573 = vld [vmem:[#allocation3 + $0x98] sm:$0xff]
        %v574 = vld [vmem:[#allocation3 + $0xa0] sm:$0xff]
        %v575 = vld [vmem:[#allocation3 + $0xa8] sm:$0xff]
        %v576 = vld [vmem:[#allocation3 + $0xb0] sm:$0xff]
        %v577 = vld [vmem:[#allocation3 + $0xb8] sm:$0xff]
        %v578 = vld [vmem:[#allocation3 + $0xc0] sm:$0xff]
        %v579 = vld [vmem:[#allocation3 + $0xc8] sm:$0xff]
        %v580 = vld [vmem:[#allocation3 + $0xd0] sm:$0xff]
        %v581 = vld [vmem:[#allocation3 + $0xd8] sm:$0xff]
        %v582 = vld [vmem:[#allocation3 + $0xe0] sm:$0xff]
        %v583 = vld [vmem:[#allocation3 + $0xe8] sm:$0xff]
        %v584 = vld [vmem:[#allocation3 + $0xf0] sm:$0xff]
        %v585 = vld [vmem:[#allocation3 + $0xf8] sm:$0xff]
        %v586 = vld [vmem:[%s4] sm:$0x1]
        %v588 = vlaneseq
        %v589 = vshrl.u32 %v588, 7
        %v590 = vsub.s32 0, %v589
        %v591 = vrot.slane %v586, %v590
        %593 = vmatprep.subr.mxu0 0.0
        %594 = vmatpush1.msra.mxu0 %v554
        %595 = vmatprep.subr.mxu0 0.0
        %596 = vmatpush1.msra.mxu0 %v555
        %597 = vmatprep.subr.mxu0 0.0
        %598 = vmatpush1.msra.mxu0 %v556
        %599 = vmatprep.subr.mxu0 0.0
        %600 = vmatpush1.msra.mxu0 %v557
        %601 = vmatprep.subr.mxu0 0.0
        %602 = vmatpush1.msra.mxu0 %v558
        %603 = vmatprep.subr.mxu0 0.0
        %604 = vmatpush1.msra.mxu0 %v559
        %605 = vmatprep.subr.mxu0 0.0
        %606 = vmatpush1.msra.mxu0 %v560
        %607 = vmatprep.subr.mxu0 0.0
        %608 = vmatpush1.msra.mxu0 %v561
        %609 = vmatprep.subr.mxu0 0.0
        %610 = vmatpush1.msra.mxu0 %v562
        %611 = vmatprep.subr.mxu0 0.0
        %612 = vmatpush1.msra.mxu0 %v563
        %613 = vmatprep.subr.mxu0 0.0
        %614 = vmatpush1.msra.mxu0 %v564
        %615 = vmatprep.subr.mxu0 0.0
        %616 = vmatpush1.msra.mxu0 %v565
        %617 = vmatprep.subr.mxu0 0.0
        %618 = vmatpush1.msra.mxu0 %v566
        %619 = vmatprep.subr.mxu0 0.0
        %620 = vmatpush1.msra.mxu0 %v567
        %621 = vmatprep.subr.mxu0 0.0
        %622 = vmatpush1.msra.mxu0 %v568
        %623 = vmatprep.subr.mxu0 0.0
        %624 = vmatpush1.msra.mxu0 %v569
        %625 = vmatprep.subr.mxu0 0.0
        %626 = vmatpush1.msra.mxu0 %v570
        %627 = vmatprep.subr.mxu0 0.0
        %628 = vmatpush1.msra.mxu0 %v571
        %629 = vmatprep.subr.mxu0 0.0
        %630 = vmatpush1.msra.mxu0 %v572
        %631 = vmatprep.subr.mxu0 0.0
        %632 = vmatpush1.msra.mxu0 %v573
        %633 = vmatprep.subr.mxu0 0.0
        %634 = vmatpush1.msra.mxu0 %v574
        %635 = vmatprep.subr.mxu0 0.0
        %636 = vmatpush1.msra.mxu0 %v575
        %637 = vmatprep.subr.mxu0 0.0
        %638 = vmatpush1.msra.mxu0 %v576
        %639 = vmatprep.subr.mxu0 0.0
        %640 = vmatpush1.msra.mxu0 %v577
        %641 = vmatprep.subr.mxu0 0.0
        %642 = vmatpush1.msra.mxu0 %v578
        %643 = vmatprep.subr.mxu0 0.0
        %644 = vmatpush1.msra.mxu0 %v579
        %645 = vmatprep.subr.mxu0 0.0
        %646 = vmatpush1.msra.mxu0 %v580
        %647 = vmatprep.subr.mxu0 0.0
        %648 = vmatpush1.msra.mxu0 %v581
        %649 = vmatprep.subr.mxu0 0.0
        %650 = vmatpush1.msra.mxu0 %v582
        %651 = vmatprep.subr.mxu0 0.0
        %652 = vmatpush1.msra.mxu0 %v583
        %653 = vmatprep.subr.mxu0 0.0
        %654 = vmatpush1.msra.mxu0 %v584
        %655 = vmatprep.subr.mxu0 0.0
        %656 = vmatpush1.msra.mxu0 %v585
        %657 = vmatprep.mubr.f32.mxu0 %v549
        %658 = vmatmul.mubr.f32.gmra.mrb[0].mxu0 %v548
        %v659 = vpop.f32.mrb[0].mxu0
        %v660 = vadd.f32 %v591, %v659
        %v661 = vpop.f32.mrb[0].mxu0
        %662 = vmatprep.mubr.f32.mxu0 %v551
        %663 = vmatmul.mubr.f32.gmra.mrb[0].mxu0 %v550
        %v664 = vpop.f32.mrb[0].mxu0
        %v665 = vadd.f32 %v591, %v664
        %v666 = vpop.f32.mrb[0].mxu0
        %667 = vmatprep.mubr.f32.mxu0 %v553
        %668 = vmatmul.mubr.f32.gmra.mrb[0].mxu0 %v552
        %v669 = vpop.f32.mrb[0].mxu0
        %v670 = vadd.f32 %v591, %v669
        %v671 = vpop.f32.mrb[0].mxu0
        %672 = vdwg.mxu0
        %673 = vadd.xlane.f32.xlu0 %v660
        %v674 = vpop.xlane.xlu0 %673
        %675 = vadd.xlane.f32.xlu0 %v665
        %v676 = vpop.xlane.xlu0 %675
        %677 = vadd.xlane.f32.xlu0 %v670
        %v678 = vpop.xlane.xlu0 %677
        %v679 = vrcp.pop 128.0
        %v680 = vmul.f32 %v674, %v679
        %v681 = vmul.f32 %v676, %v679
        %v682 = vmul.f32 %v678, %v679
        %v683 = vmul.f32 %v660, %v660
        %v684 = vmul.f32 %v665, %v665
        %v685 = vmul.f32 %v670, %v670
        %686 = vadd.xlane.f32.xlu0 %v683
        %v687 = vpop.xlane.xlu0 %686
        %688 = vadd.xlane.f32.xlu0 %v684
        %v689 = vpop.xlane.xlu0 %688
        %690 = vadd.xlane.f32.xlu0 %v685
        %v691 = vpop.xlane.xlu0 %690
        %v692 = vmul.f32 %v687, %v679
        %v693 = vmul.f32 %v689, %v679
        %v694 = vmul.f32 %v691, %v679
        %v695 = vmul.f32 %v680, %v680
        %v696 = vmul.f32 %v681, %v681
        %v697 = vmul.f32 %v682, %v682
        %v698 = vsub.f32 %v692, %v695
        %v699 = vsub.f32 %v693, %v696
        %v700 = vsub.f32 %v694, %v697
        %v701 = vsub.f32 %v660, %v680
        %v702 = vsub.f32 %v665, %v681
        %v703 = vsub.f32 %v670, %v682
        %v704 = vadd.f32 %v698, 1e-05
        %v705 = vadd.f32 %v699, 1e-05
        %v706 = vadd.f32 %v700, 1e-05
        %v707 = vrsqrt.pop %v704
        %v708 = vrsqrt.pop %v705
        %v709 = vrsqrt.pop %v706
        %v710 = vmul.f32 %v701, %v707
        %v711 = vmul.f32 %v702, %v708
        %v712 = vmul.f32 %v703, %v709
        %v713 = vld [vmem:[%s5] sm:$0x1]
        %v715 = vlaneseq
        %v716 = vshrl.u32 %v715, 7
        %v717 = vsub.s32 0, %v716
        %v718 = vrot.slane %v713, %v717
        %v720 = vmul.f32 %v710, %v718
        %v721 = vmul.f32 %v711, %v718
        %v722 = vmul.f32 %v712, %v718
        %v723 = vld [vmem:[%s6] sm:$0x1]
        %v725 = vlaneseq
        %v726 = vshrl.u32 %v725, 7
        %v727 = vsub.s32 0, %v726
        %v728 = vrot.slane %v723, %v727
        %v730 = vadd.f32 %v720, %v728
        %v731 = vadd.f32 %v721, %v728
        %v732 = vadd.f32 %v722, %v728
        %v733 = vmax.f32 %v730, 0.0
        %v734 = vmax.f32 %v731, 0.0
        %v735 = vmax.f32 %v732, 0.0
        %v736 = vld [vmem:[%s542] sm:$0xff]
        %v737 = vld [vmem:[%s542 + $0x8] sm:$0xff]
        %v738 = vld [vmem:[%s542 + $0x10] sm:$0xff]
        %v739 = vld [vmem:[%s7] sm:$0xff]
        %v740 = vld [vmem:[%s7 + $0x8] sm:$0xff]
        %v741 = vld [vmem:[%s7 + $0x10] sm:$0xff]
        %v742 = vld [vmem:[%s7 + $0x18] sm:$0xff]
        %v743 = vld [vmem:[%s7 + $0x20] sm:$0xff]
        %v744 = vld [vmem:[%s7 + $0x28] sm:$0xff]
        %v745 = vld [vmem:[%s7 + $0x30] sm:$0xff]
        %v746 = vld [vmem:[%s7 + $0x38] sm:$0xff]
        %v747 = vld [vmem:[%s7 + $0x40] sm:$0xff]
        %v748 = vld [vmem:[%s7 + $0x48] sm:$0xff]
        %v749 = vld [vmem:[%s7 + $0x50] sm:$0xff]
        %v750 = vld [vmem:[%s7 + $0x58] sm:$0xff]
        %v751 = vld [vmem:[%s7 + $0x60] sm:$0xff]
        %v752 = vld [vmem:[%s7 + $0x68] sm:$0xff]
        %v753 = vld [vmem:[%s7 + $0x70] sm:$0xff]
        %v754 = vld [vmem:[%s7 + $0x78] sm:$0xff]
        %v755 = vld [vmem:[%s7 + $0x80] sm:$0xff]
        %v756 = vld [vmem:[%s7 + $0x88] sm:$0xff]
        %v757 = vld [vmem:[%s7 + $0x90] sm:$0xff]
        %v758 = vld [vmem:[%s7 + $0x98] sm:$0xff]
        %v759 = vld [vmem:[%s7 + $0xa0] sm:$0xff]
        %v760 = vld [vmem:[%s7 + $0xa8] sm:$0xff]
        %v761 = vld [vmem:[%s7 + $0xb0] sm:$0xff]
        %v762 = vld [vmem:[%s7 + $0xb8] sm:$0xff]
        %v763 = vld [vmem:[%s7 + $0xc0] sm:$0xff]
        %v764 = vld [vmem:[%s7 + $0xc8] sm:$0xff]
        %v765 = vld [vmem:[%s7 + $0xd0] sm:$0xff]
        %v766 = vld [vmem:[%s7 + $0xd8] sm:$0xff]
        %v767 = vld [vmem:[%s7 + $0xe0] sm:$0xff]
        %v768 = vld [vmem:[%s7 + $0xe8] sm:$0xff]
        %v769 = vld [vmem:[%s7 + $0xf0] sm:$0xff]
        %v770 = vld [vmem:[%s7 + $0xf8] sm:$0xff]
        %v771 = vld [vmem:[%s7 + $0x100] sm:$0xff]
        %v772 = vld [vmem:[%s7 + $0x108] sm:$0xff]
        %v773 = vld [vmem:[%s7 + $0x110] sm:$0xff]
        %v774 = vld [vmem:[%s7 + $0x118] sm:$0xff]
        %v775 = vld [vmem:[%s7 + $0x120] sm:$0xff]
        %v776 = vld [vmem:[%s7 + $0x128] sm:$0xff]
        %v777 = vld [vmem:[%s7 + $0x130] sm:$0xff]
        %v778 = vld [vmem:[%s7 + $0x138] sm:$0xff]
        %v779 = vld [vmem:[%s7 + $0x140] sm:$0xff]
        %v780 = vld [vmem:[%s7 + $0x148] sm:$0xff]
        %v781 = vld [vmem:[%s7 + $0x150] sm:$0xff]
        %v782 = vld [vmem:[%s7 + $0x158] sm:$0xff]
        %v783 = vld [vmem:[%s7 + $0x160] sm:$0xff]
        %v784 = vld [vmem:[%s7 + $0x168] sm:$0xff]
        %v785 = vld [vmem:[%s7 + $0x170] sm:$0xff]
        %v786 = vld [vmem:[%s7 + $0x178] sm:$0xff]
        %v787 = vld [vmem:[%s7 + $0x180] sm:$0xff]
        %v788 = vld [vmem:[%s7 + $0x188] sm:$0xff]
        %v789 = vld [vmem:[%s7 + $0x190] sm:$0xff]
        %v790 = vld [vmem:[%s7 + $0x198] sm:$0xff]
        %v791 = vld [vmem:[%s7 + $0x1a0] sm:$0xff]
        %v792 = vld [vmem:[%s7 + $0x1a8] sm:$0xff]
        %v793 = vld [vmem:[%s7 + $0x1b0] sm:$0xff]
        %v794 = vld [vmem:[%s7 + $0x1b8] sm:$0xff]
        %v795 = vld [vmem:[%s7 + $0x1c0] sm:$0xff]
        %v796 = vld [vmem:[%s7 + $0x1c8] sm:$0xff]
        %v797 = vld [vmem:[%s7 + $0x1d0] sm:$0xff]
        %v798 = vld [vmem:[%s7 + $0x1d8] sm:$0xff]
        %v799 = vld [vmem:[%s7 + $0x1e0] sm:$0xff]
        %v800 = vld [vmem:[%s7 + $0x1e8] sm:$0xff]
        %v801 = vld [vmem:[%s7 + $0x1f0] sm:$0xff]
        %v802 = vld [vmem:[%s7 + $0x1f8] sm:$0xff]
        %v803 = vld [vmem:[%s8] sm:$0xf]
        %v805 = vlaneseq
        %v806 = vshrl.u32 %v805, 7
        %v807 = vsub.s32 0, %v806
        %v808 = vrot.slane %v803, %v807
        %v809 = vlaneseq
        %v810 = vshrl.u32 %v809, 7
        %v811 = vsub.s32 1, %v810
        %v812 = vrot.slane %v803, %v811
        %v813 = vlaneseq
        %v814 = vshrl.u32 %v813, 7
        %v815 = vsub.s32 2, %v814
        %v816 = vrot.slane %v803, %v815
        %v817 = vlaneseq
        %v818 = vshrl.u32 %v817, 7
        %v819 = vsub.s32 3, %v818
        %v820 = vrot.slane %v803, %v819
        %825 = vmatprep.subr.mxu0 %v740
        %826 = vmatpush1.msra.mxu0 %v739
        %827 = vmatprep.subr.mxu0 %v744
        %828 = vmatpush1.msra.mxu0 %v743
        %829 = vmatprep.subr.mxu0 %v748
        %830 = vmatpush1.msra.mxu0 %v747
        %831 = vmatprep.subr.mxu0 %v752
        %832 = vmatpush1.msra.mxu0 %v751
        %833 = vmatprep.subr.mxu0 %v756
        %834 = vmatpush1.msra.mxu0 %v755
        %835 = vmatprep.subr.mxu0 %v760
        %836 = vmatpush1.msra.mxu0 %v759
        %837 = vmatprep.subr.mxu0 %v764
        %838 = vmatpush1.msra.mxu0 %v763
        %839 = vmatprep.subr.mxu0 %v768
        %840 = vmatpush1.msra.mxu0 %v767
        %841 = vmatprep.subr.mxu0 %v772
        %842 = vmatpush1.msra.mxu0 %v771
        %843 = vmatprep.subr.mxu0 %v776
        %844 = vmatpush1.msra.mxu0 %v775
        %845 = vmatprep.subr.mxu0 %v780
        %846 = vmatpush1.msra.mxu0 %v779
        %847 = vmatprep.subr.mxu0 %v784
        %848 = vmatpush1.msra.mxu0 %v783
        %849 = vmatprep.subr.mxu0 %v788
        %850 = vmatpush1.msra.mxu0 %v787
        %851 = vmatprep.subr.mxu0 %v792
        %852 = vmatpush1.msra.mxu0 %v791
        %853 = vmatprep.subr.mxu0 %v796
        %854 = vmatpush1.msra.mxu0 %v795
        %855 = vmatprep.subr.mxu0 %v800
        %856 = vmatpush1.msra.mxu0 %v799
        %857 = vmatprep.subr.mxu0 0.0
        %858 = vmatpush1.msra.mxu0 0.0
        %859 = vmatprep.subr.mxu0 0.0
        %860 = vmatpush1.msra.mxu0 0.0
        %861 = vmatprep.subr.mxu0 0.0
        %862 = vmatpush1.msra.mxu0 0.0
        %863 = vmatprep.subr.mxu0 0.0
        %864 = vmatpush1.msra.mxu0 0.0
        %865 = vmatprep.subr.mxu0 0.0
        %866 = vmatpush1.msra.mxu0 0.0
        %867 = vmatprep.subr.mxu0 0.0
        %868 = vmatpush1.msra.mxu0 0.0
        %869 = vmatprep.subr.mxu0 0.0
        %870 = vmatpush1.msra.mxu0 0.0
        %871 = vmatprep.subr.mxu0 0.0
        %872 = vmatpush1.msra.mxu0 0.0
        %873 = vmatprep.subr.mxu0 0.0
        %874 = vmatpush1.msra.mxu0 0.0
        %875 = vmatprep.subr.mxu0 0.0
        %876 = vmatpush1.msra.mxu0 0.0
        %877 = vmatprep.subr.mxu0 0.0
        %878 = vmatpush1.msra.mxu0 0.0
        %879 = vmatprep.subr.mxu0 0.0
        %880 = vmatpush1.msra.mxu0 0.0
        %881 = vmatprep.subr.mxu0 0.0
        %882 = vmatpush1.msra.mxu0 0.0
        %883 = vmatprep.subr.mxu0 0.0
        %884 = vmatpush1.msra.mxu0 0.0
        %885 = vmatprep.subr.mxu0 0.0
        %886 = vmatpush1.msra.mxu0 0.0
        %887 = vmatprep.subr.mxu0 0.0
        %888 = vmatpush1.msra.mxu0 0.0
        %889 = vmatprep.mubr.f32.mxu0 0.0
        %890 = vmatmul.mubr.f32.gmra.mrb[0].mxu0 %v733
        %v891 = vpop.f32.mrb[0].mxu0
        %v892 = vadd.f32 %v808, %v891
        %v893 = vpop.f32.mrb[0].mxu0
        %v894 = vadd.f32 %v812, %v893
        %895 = vmatprep.mubr.f32.mxu0 0.0
        %896 = vmatmul.mubr.f32.gmra.mrb[0].mxu0 %v734
        %v897 = vpop.f32.mrb[0].mxu0
        %v898 = vadd.f32 %v808, %v897
        %v899 = vpop.f32.mrb[0].mxu0
        %v900 = vadd.f32 %v812, %v899
        %901 = vmatprep.mubr.f32.mxu0 0.0
        %902 = vmatmul.mubr.f32.gmra.mrb[0].mxu0 %v735
        %v903 = vpop.f32.mrb[0].mxu0
        %v904 = vadd.f32 %v808, %v903
        %v905 = vpop.f32.mrb[0].mxu0
        %v906 = vadd.f32 %v812, %v905
        %907 = vdwg.mxu0
        %908 = vmatprep.subr.mxu0 %v742
        %909 = vmatpush1.msra.mxu0 %v741
        %910 = vmatprep.subr.mxu0 %v746
        %911 = vmatpush1.msra.mxu0 %v745
        %912 = vmatprep.subr.mxu0 %v750
        %913 = vmatpush1.msra.mxu0 %v749
        %914 = vmatprep.subr.mxu0 %v754
        %915 = vmatpush1.msra.mxu0 %v753
        %916 = vmatprep.subr.mxu0 %v758
        %917 = vmatpush1.msra.mxu0 %v757
        %918 = vmatprep.subr.mxu0 %v762
        %919 = vmatpush1.msra.mxu0 %v761
        %920 = vmatprep.subr.mxu0 %v766
        %921 = vmatpush1.msra.mxu0 %v765
        %922 = vmatprep.subr.mxu0 %v770
        %923 = vmatpush1.msra.mxu0 %v769
        %924 = vmatprep.subr.mxu0 %v774
        %925 = vmatpush1.msra.mxu0 %v773
        %926 = vmatprep.subr.mxu0 %v778
        %927 = vmatpush1.msra.mxu0 %v777
        %928 = vmatprep.subr.mxu0 %v782
        %929 = vmatpush1.msra.mxu0 %v781
        %930 = vmatprep.subr.mxu0 %v786
        %931 = vmatpush1.msra.mxu0 %v785
        %932 = vmatprep.subr.mxu0 %v790
        %933 = vmatpush1.msra.mxu0 %v789
        %934 = vmatprep.subr.mxu0 %v794
        %935 = vmatpush1.msra.mxu0 %v793
        %936 = vmatprep.subr.mxu0 %v798
        %937 = vmatpush1.msra.mxu0 %v797
        %938 = vmatprep.subr.mxu0 %v802
        %939 = vmatpush1.msra.mxu0 %v801
        %940 = vmatprep.subr.mxu0 0.0
        %941 = vmatpush1.msra.mxu0 0.0
        %942 = vmatprep.subr.mxu0 0.0
        %943 = vmatpush1.msra.mxu0 0.0
        %944 = vmatprep.subr.mxu0 0.0
        %945 = vmatpush1.msra.mxu0 0.0
        %946 = vmatprep.subr.mxu0 0.0
        %947 = vmatpush1.msra.mxu0 0.0
        %948 = vmatprep.subr.mxu0 0.0
        %949 = vmatpush1.msra.mxu0 0.0
        %950 = vmatprep.subr.mxu0 0.0
        %951 = vmatpush1.msra.mxu0 0.0
        %952 = vmatprep.subr.mxu0 0.0
        %953 = vmatpush1.msra.mxu0 0.0
        %954 = vmatprep.subr.mxu0 0.0
        %955 = vmatpush1.msra.mxu0 0.0
        %956 = vmatprep.subr.mxu0 0.0
        %957 = vmatpush1.msra.mxu0 0.0
        %958 = vmatprep.subr.mxu0 0.0
        %959 = vmatpush1.msra.mxu0 0.0
        %960 = vmatprep.subr.mxu0 0.0
        %961 = vmatpush1.msra.mxu0 0.0
        %962 = vmatprep.subr.mxu0 0.0
        %963 = vmatpush1.msra.mxu0 0.0
        %964 = vmatprep.subr.mxu0 0.0
        %965 = vmatpush1.msra.mxu0 0.0
        %966 = vmatprep.subr.mxu0 0.0
        %967 = vmatpush1.msra.mxu0 0.0
        %968 = vmatprep.subr.mxu0 0.0
        %969 = vmatpush1.msra.mxu0 0.0
        %970 = vmatprep.subr.mxu0 0.0
        %971 = vmatpush1.msra.mxu0 0.0
        %972 = vmatprep.mubr.f32.mxu0 0.0
        %973 = vmatmul.mubr.f32.gmra.mrb[0].mxu0 %v733
        %v974 = vpop.f32.mrb[0].mxu0
        %v975 = vadd.f32 %v816, %v974
        %v976 = vpop.f32.mrb[0].mxu0
        %v977 = vadd.f32 %v820, %v976
        %978 = vmatprep.mubr.f32.mxu0 0.0
        %979 = vmatmul.mubr.f32.gmra.mrb[0].mxu0 %v734
        %v980 = vpop.f32.mrb[0].mxu0
        %v981 = vadd.f32 %v816, %v980
        %v982 = vpop.f32.mrb[0].mxu0
        %v983 = vadd.f32 %v820, %v982
        %984 = vmatprep.mubr.f32.mxu0 0.0
        %985 = vmatmul.mubr.f32.gmra.mrb[0].mxu0 %v735
        %v986 = vpop.f32.mrb[0].mxu0
        %v987 = vadd.f32 %v816, %v986
        %v988 = vpop.f32.mrb[0].mxu0
        %v989 = vadd.f32 %v820, %v988
        %990 = vdwg.mxu0
        %v991 = vld [vmem:[#allocation5] sm:$0xff]
        %v992 = vld [vmem:[#allocation5 + $0x8] sm:$0xff]
        %v993 = vld [vmem:[#allocation5 + $0x10] sm:$0xff]
        %v994 = vld [vmem:[#allocation5 + $0x18] sm:$0xff]
        %v995 = vld [vmem:[#allocation5 + $0x20] sm:$0xff]
        %v996 = vld [vmem:[#allocation5 + $0x28] sm:$0xff]
        %v997 = vld [vmem:[#allocation5 + $0x30] sm:$0xff]
        %v998 = vld [vmem:[#allocation5 + $0x38] sm:$0xff]
        %v999 = vld [vmem:[#allocation5 + $0x40] sm:$0xff]
        %v1000 = vld [vmem:[#allocation5 + $0x48] sm:$0xff]
        %v1001 = vld [vmem:[#allocation5 + $0x50] sm:$0xff]
        %v1002 = vld [vmem:[#allocation5 + $0x58] sm:$0xff]
        %v1003 = vld [vmem:[#allocation5 + $0x60] sm:$0xff]
        %v1004 = vld [vmem:[#allocation5 + $0x68] sm:$0xff]
        %v1005 = vld [vmem:[#allocation5 + $0x70] sm:$0xff]
        %v1006 = vld [vmem:[#allocation5 + $0x78] sm:$0xff]
        %v1007 = vld [vmem:[#allocation5 + $0x80] sm:$0xff]
        %v1008 = vld [vmem:[#allocation5 + $0x88] sm:$0xff]
        %v1009 = vld [vmem:[#allocation5 + $0x90] sm:$0xff]
        %v1010 = vld [vmem:[#allocation5 + $0x98] sm:$0xff]
        %v1011 = vld [vmem:[#allocation5 + $0xa0] sm:$0xff]
        %v1012 = vld [vmem:[#allocation5 + $0xa8] sm:$0xff]
        %v1013 = vld [vmem:[#allocation5 + $0xb0] sm:$0xff]
        %v1014 = vld [vmem:[#allocation5 + $0xb8] sm:$0xff]
        %v1015 = vld [vmem:[#allocation5 + $0xc0] sm:$0xff]
        %v1016 = vld [vmem:[#allocation5 + $0xc8] sm:$0xff]
        %v1017 = vld [vmem:[#allocation5 + $0xd0] sm:$0xff]
        %v1018 = vld [vmem:[#allocation5 + $0xd8] sm:$0xff]
        %v1019 = vld [vmem:[#allocation5 + $0xe0] sm:$0xff]
        %v1020 = vld [vmem:[#allocation5 + $0xe8] sm:$0xff]
        %v1021 = vld [vmem:[#allocation5 + $0xf0] sm:$0xff]
        %v1022 = vld [vmem:[#allocation5 + $0xf8] sm:$0xff]
        %1023 = vmatprep.subr.mxu0 %v992
        %1024 = vmatpush1.msra.mxu0 %v991
        %1025 = vmatprep.subr.mxu0 %v994
        %1026 = vmatpush1.msra.mxu0 %v993
        %1027 = vmatprep.subr.mxu0 %v996
        %1028 = vmatpush1.msra.mxu0 %v995
        %1029 = vmatprep.subr.mxu0 %v998
        %1030 = vmatpush1.msra.mxu0 %v997
        %1031 = vmatprep.subr.mxu0 %v1000
        %1032 = vmatpush1.msra.mxu0 %v999
        %1033 = vmatprep.subr.mxu0 %v1002
        %1034 = vmatpush1.msra.mxu0 %v1001
        %1035 = vmatprep.subr.mxu0 %v1004
        %1036 = vmatpush1.msra.mxu0 %v1003
        %1037 = vmatprep.subr.mxu0 %v1006
        %1038 = vmatpush1.msra.mxu0 %v1005
        %1039 = vmatprep.subr.mxu0 %v1008
        %1040 = vmatpush1.msra.mxu0 %v1007
        %1041 = vmatprep.subr.mxu0 %v1010
        %1042 = vmatpush1.msra.mxu0 %v1009
        %1043 = vmatprep.subr.mxu0 %v1012
        %1044 = vmatpush1.msra.mxu0 %v1011
        %1045 = vmatprep.subr.mxu0 %v1014
        %1046 = vmatpush1.msra.mxu0 %v1013
        %1047 = vmatprep.subr.mxu0 %v1016
        %1048 = vmatpush1.msra.mxu0 %v1015
        %1049 = vmatprep.subr.mxu0 %v1018
        %1050 = vmatpush1.msra.mxu0 %v1017
        %1051 = vmatprep.subr.mxu0 %v1020
        %1052 = vmatpush1.msra.mxu0 %v1019
        %1053 = vmatprep.subr.mxu0 %v1022
        %1054 = vmatpush1.msra.mxu0 %v1021
        %1055 = vmatprep.subr.mxu0 0.0
        %1056 = vmatpush1.msra.mxu0 0.0
        %1057 = vmatprep.subr.mxu0 0.0
        %1058 = vmatpush1.msra.mxu0 0.0
        %1059 = vmatprep.subr.mxu0 0.0
        %1060 = vmatpush1.msra.mxu0 0.0
        %1061 = vmatprep.subr.mxu0 0.0
        %1062 = vmatpush1.msra.mxu0 0.0
        %1063 = vmatprep.subr.mxu0 0.0
        %1064 = vmatpush1.msra.mxu0 0.0
        %1065 = vmatprep.subr.mxu0 0.0
        %1066 = vmatpush1.msra.mxu0 0.0
        %1067 = vmatprep.subr.mxu0 0.0
        %1068 = vmatpush1.msra.mxu0 0.0
        %1069 = vmatprep.subr.mxu0 0.0
        %1070 = vmatpush1.msra.mxu0 0.0
        %1071 = vmatprep.subr.mxu0 0.0
        %1072 = vmatpush1.msra.mxu0 0.0
        %1073 = vmatprep.subr.mxu0 0.0
        %1074 = vmatpush1.msra.mxu0 0.0
        %1075 = vmatprep.subr.mxu0 0.0
        %1076 = vmatpush1.msra.mxu0 0.0
        %1077 = vmatprep.subr.mxu0 0.0
        %1078 = vmatpush1.msra.mxu0 0.0
        %1079 = vmatprep.subr.mxu0 0.0
        %1080 = vmatpush1.msra.mxu0 0.0
        %1081 = vmatprep.subr.mxu0 0.0
        %1082 = vmatpush1.msra.mxu0 0.0
        %1083 = vmatprep.subr.mxu0 0.0
        %1084 = vmatpush1.msra.mxu0 0.0
        %1085 = vmatprep.subr.mxu0 0.0
        %1086 = vmatpush1.msra.mxu0 0.0
        %1087 = vmatprep.mubr.f32.mxu0 0.0
        %1088 = vmatmul.mubr.f32.gmra.mrb[0].mxu0 %v733
        %v1089 = vpop.f32.mrb[0].mxu0
        %v1090 = vadd.f32 0.0, %v1089
        %v1091 = vpop.f32.mrb[0].mxu0
        %v1092 = vadd.f32 0.0, %v1091
        %1093 = vmatprep.mubr.f32.mxu0 0.0
        %1094 = vmatmul.mubr.f32.gmra.mrb[0].mxu0 %v734
        %v1095 = vpop.f32.mrb[0].mxu0
        %v1096 = vadd.f32 0.0, %v1095
        %v1097 = vpop.f32.mrb[0].mxu0
        %v1098 = vadd.f32 0.0, %v1097
        %1099 = vmatprep.mubr.f32.mxu0 0.0
        %1100 = vmatmul.mubr.f32.gmra.mrb[0].mxu0 %v735
        %v1101 = vpop.f32.mrb[0].mxu0
        %v1102 = vadd.f32 0.0, %v1101
        %v1103 = vpop.f32.mrb[0].mxu0
        %v1104 = vadd.f32 0.0, %v1103
        %1105 = vdwg.mxu0
        %1106 = vmatprep.subr.mxu0 0.0
        %1107 = vmatpush1.xpose.msra.mxu0 %v894
        %1108 = vmatprep.subr.mxu0 0.0
        %1109 = vmatpush1.xpose.msra.mxu0 %v900
        %1110 = vmatprep.subr.mxu0 0.0
        %1111 = vmatpush1.xpose.msra.mxu0 %v906
        %1112 = vmatprep.subr.mxu0 0.0
        %1113 = vmatpush1.xpose.msra.mxu0 0.0
        %1114 = vmatprep.subr.mxu0 0.0
        %1115 = vmatpush1.xpose.msra.mxu0 0.0
        %1116 = vmatprep.subr.mxu0 0.0
        %1117 = vmatpush1.xpose.msra.mxu0 0.0
        %1118 = vmatprep.subr.mxu0 0.0
        %1119 = vmatpush1.xpose.msra.mxu0 0.0
        %1120 = vmatprep.subr.mxu0 0.0
        %1121 = vmatpush1.xpose.msra.mxu0 0.0
        %1122 = vmatprep.subr.mxu0 0.0
        %1123 = vmatpush1.xpose.msra.mxu0 0.0
        %1124 = vmatprep.subr.mxu0 0.0
        %1125 = vmatpush1.xpose.msra.mxu0 0.0
        %1126 = vmatprep.subr.mxu0 0.0
        %1127 = vmatpush1.xpose.msra.mxu0 0.0
        %1128 = vmatprep.subr.mxu0 0.0
        %1129 = vmatpush1.xpose.msra.mxu0 0.0
        %1130 = vmatprep.subr.mxu0 0.0
        %1131 = vmatpush1.xpose.msra.mxu0 0.0
        %1132 = vmatprep.subr.mxu0 0.0
        %1133 = vmatpush1.xpose.msra.mxu0 0.0
        %1134 = vmatprep.subr.mxu0 0.0
        %1135 = vmatpush1.xpose.msra.mxu0 0.0
        %1136 = vmatprep.subr.mxu0 0.0
        %1137 = vmatpush1.xpose.msra.mxu0 0.0
        %1138 = vmatprep.subr.mxu0 0.0
        %1139 = vmatpush1.xpose.msra.mxu0 0.0
        %1140 = vmatprep.subr.mxu0 0.0
        %1141 = vmatpush1.xpose.msra.mxu0 0.0
        %1142 = vmatprep.subr.mxu0 0.0
        %1143 = vmatpush1.xpose.msra.mxu0 0.0
        %1144 = vmatprep.subr.mxu0 0.0
        %1145 = vmatpush1.xpose.msra.mxu0 0.0
        %1146 = vmatprep.subr.mxu0 0.0
        %1147 = vmatpush1.xpose.msra.mxu0 0.0
        %1148 = vmatprep.subr.mxu0 0.0
        %1149 = vmatpush1.xpose.msra.mxu0 0.0
        %1150 = vmatprep.subr.mxu0 0.0
        %1151 = vmatpush1.xpose.msra.mxu0 0.0
        %1152 = vmatprep.subr.mxu0 0.0
        %1153 = vmatpush1.xpose.msra.mxu0 0.0
        %1154 = vmatprep.subr.mxu0 0.0
        %1155 = vmatpush1.xpose.msra.mxu0 0.0
        %1156 = vmatprep.subr.mxu0 0.0
        %1157 = vmatpush1.xpose.msra.mxu0 0.0
        %1158 = vmatprep.subr.mxu0 0.0
        %1159 = vmatpush1.xpose.msra.mxu0 0.0
        %1160 = vmatprep.subr.mxu0 0.0
        %1161 = vmatpush1.xpose.msra.mxu0 0.0
        %1162 = vmatprep.subr.mxu0 0.0
        %1163 = vmatpush1.xpose.msra.mxu0 0.0
        %1164 = vmatprep.subr.mxu0 0.0
        %1165 = vmatpush1.xpose.msra.mxu0 0.0
        %1166 = vmatprep.subr.mxu0 0.0
        %1167 = vmatpush1.xpose.msra.mxu0 0.0
        %1168 = vmatprep.subr.mxu0 0.0
        %1169 = vmatpush1.xpose.msra.mxu0 0.0
        %1170 = vmatprep.mubr.f32.mxu0 0.0
        %1171 = vmatmul.mubr.f32.gmra.mrb[0].mxu0 %v892
        %v1172 = vpop.f32.mrb[0].mxu0
        %v1173 = vadd.f32 0.0, %v1172
        %v1174 = vpop.f32.mrb[0].mxu0
        %1175 = vmatprep.mubr.f32.mxu0 0.0
        %1176 = vmatmul.mubr.f32.gmra.mrb[0].mxu0 %v898
        %v1177 = vpop.f32.mrb[0].mxu0
        %v1178 = vadd.f32 0.0, %v1177
        %v1179 = vpop.f32.mrb[0].mxu0
        %1180 = vmatprep.mubr.f32.mxu0 0.0
        %1181 = vmatmul.mubr.f32.gmra.mrb[0].mxu0 %v904
        %v1182 = vpop.f32.mrb[0].mxu0
        %v1183 = vadd.f32 0.0, %v1182
        %v1184 = vpop.f32.mrb[0].mxu0
        %1185 = vdwg.mxu0
        %v1186 = vmul.f32 %v1173, 0.088388346
        %v1187 = vmul.f32 %v1178, 0.088388346
        %v1188 = vmul.f32 %v1183, 0.088388346
        %vm1189 = vcmp.ne.f32.partialorder %v736, 0.0
        %vm1190 = vcmp.ne.f32.partialorder %v737, 0.0
        %vm1191 = vcmp.ne.f32.partialorder %v738, 0.0
        %v1192 = vsel %vm1189, -1e+30, %v1186
        %v1193 = vsel %vm1190, -1e+30, %v1187
        %v1194 = vsel %vm1191, -1e+30, %v1188
        %vm1195 = vcmask 195584
        %v1196 = vsel %vm1195, %v1192, -inf
        %1197 = vmax.xlane.f32.xlu0 %v1196
        %v1198 = vpop.xlane.xlu0 %1197
        %v1199 = vsel %vm1195, %v1193, -inf
        %1200 = vmax.xlane.f32.xlu0 %v1199
        %v1201 = vpop.xlane.xlu0 %1200
        %v1202 = vsel %vm1195, %v1194, -inf
        %1203 = vmax.xlane.f32.xlu0 %v1202
        %v1204 = vpop.xlane.xlu0 %1203
        %v1205 = vsub.f32 %v1192, %v1198
        %v1206 = vsub.f32 %v1193, %v1201
        %v1207 = vsub.f32 %v1194, %v1204
        %v1208 = vmul.f32 %v1205, 1.442695
        %v1209 = vpow.pop %v1208
        %v1210 = vmul.f32 %v1206, 1.442695
        %v1211 = vpow.pop %v1210
        %v1212 = vmul.f32 %v1207, 1.442695
        %v1213 = vpow.pop %v1212
        %v1214 = vsel %vm1195, %v1209, 0.0
        %1215 = vadd.xlane.f32.xlu0 %v1214
        %v1216 = vpop.xlane.xlu0 %1215
        %v1217 = vsel %vm1195, %v1211, 0.0
        %1218 = vadd.xlane.f32.xlu0 %v1217
        %v1219 = vpop.xlane.xlu0 %1218
        %v1220 = vsel %vm1195, %v1213, 0.0
        %1221 = vadd.xlane.f32.xlu0 %v1220
        %v1222 = vpop.xlane.xlu0 %1221
        %v1223 = vrcp.pop %v1216
        %v1224 = vrcp.pop %v1219
        %v1225 = vrcp.pop %v1222
        %v1226 = vmul.f32 %v1209, %v1223
        %v1227 = vmul.f32 %v1211, %v1224
        %v1228 = vmul.f32 %v1213, %v1225
        %v1230 = vsel %vm1195, %v1226, 0
        %v1233 = vsel %vm1195, %v1227, 0
        %v1236 = vsel %vm1195, %v1228, 0
        %1238 = vmatprep.subr.mxu0 0.0
        %1239 = vmatpush1.msra.mxu0 %v1090
        %1240 = vmatprep.subr.mxu0 0.0
        %1241 = vmatpush1.msra.mxu0 %v1096
        %1242 = vmatprep.subr.mxu0 0.0
        %1243 = vmatpush1.msra.mxu0 %v1102
        %1244 = vmatprep.subr.mxu0 0.0
        %1245 = vmatpush1.msra.mxu0 0.0
        %1246 = vmatprep.subr.mxu0 0.0
        %1247 = vmatpush1.msra.mxu0 0.0
        %1248 = vmatprep.subr.mxu0 0.0
        %1249 = vmatpush1.msra.mxu0 0.0
        %1250 = vmatprep.subr.mxu0 0.0
        %1251 = vmatpush1.msra.mxu0 0.0
        %1252 = vmatprep.subr.mxu0 0.0
        %1253 = vmatpush1.msra.mxu0 0.0
        %1254 = vmatprep.subr.mxu0 0.0
        %1255 = vmatpush1.msra.mxu0 0.0
        %1256 = vmatprep.subr.mxu0 0.0
        %1257 = vmatpush1.msra.mxu0 0.0
        %1258 = vmatprep.subr.mxu0 0.0
        %1259 = vmatpush1.msra.mxu0 0.0
        %1260 = vmatprep.subr.mxu0 0.0
        %1261 = vmatpush1.msra.mxu0 0.0
        %1262 = vmatprep.subr.mxu0 0.0
        %1263 = vmatpush1.msra.mxu0 0.0
        %1264 = vmatprep.subr.mxu0 0.0
        %1265 = vmatpush1.msra.mxu0 0.0
        %1266 = vmatprep.subr.mxu0 0.0
        %1267 = vmatpush1.msra.mxu0 0.0
        %1268 = vmatprep.subr.mxu0 0.0
        %1269 = vmatpush1.msra.mxu0 0.0
        %1270 = vmatprep.subr.mxu0 0.0
        %1271 = vmatpush1.msra.mxu0 0.0
        %1272 = vmatprep.subr.mxu0 0.0
        %1273 = vmatpush1.msra.mxu0 0.0
        %1274 = vmatprep.subr.mxu0 0.0
        %1275 = vmatpush1.msra.mxu0 0.0
        %1276 = vmatprep.subr.mxu0 0.0
        %1277 = vmatpush1.msra.mxu0 0.0
        %1278 = vmatprep.subr.mxu0 0.0
        %1279 = vmatpush1.msra.mxu0 0.0
        %1280 = vmatprep.subr.mxu0 0.0
        %1281 = vmatpush1.msra.mxu0 0.0
        %1282 = vmatprep.subr.mxu0 0.0
        %1283 = vmatpush1.msra.mxu0 0.0
        %1284 = vmatprep.subr.mxu0 0.0
        %1285 = vmatpush1.msra.mxu0 0.0
        %1286 = vmatprep.subr.mxu0 0.0
        %1287 = vmatpush1.msra.mxu0 0.0
        %1288 = vmatprep.subr.mxu0 0.0
        %1289 = vmatpush1.msra.mxu0 0.0
        %1290 = vmatprep.subr.mxu0 0.0
        %1291 = vmatpush1.msra.mxu0 0.0
        %1292 = vmatprep.subr.mxu0 0.0
        %1293 = vmatpush1.msra.mxu0 0.0
        %1294 = vmatprep.subr.mxu0 0.0
        %1295 = vmatpush1.msra.mxu0 0.0
        %1296 = vmatprep.subr.mxu0 0.0
        %1297 = vmatpush1.msra.mxu0 0.0
        %1298 = vmatprep.subr.mxu0 0.0
        %1299 = vmatpush1.msra.mxu0 0.0
        %1300 = vmatprep.subr.mxu0 0.0
        %1301 = vmatpush1.msra.mxu0 0.0
        %1302 = vmatprep.mubr.f32.mxu0 0.0
        %1303 = vmatmul.mubr.f32.gmra.mrb[0].mxu0 %v1230
        %v1304 = vpop.f32.mrb[0].mxu0
        %v1305 = vadd.f32 0.0, %v1304
        %v1306 = vpop.f32.mrb[0].mxu0
        %1307 = vmatprep.mubr.f32.mxu0 0.0
        %1308 = vmatmul.mubr.f32.gmra.mrb[0].mxu0 %v1233
        %v1309 = vpop.f32.mrb[0].mxu0
        %v1310 = vadd.f32 0.0, %v1309
        %v1311 = vpop.f32.mrb[0].mxu0
        %1312 = vmatprep.mubr.f32.mxu0 0.0
        %1313 = vmatmul.mubr.f32.gmra.mrb[0].mxu0 %v1236
        %v1314 = vpop.f32.mrb[0].mxu0
        %v1315 = vadd.f32 0.0, %v1314
        %v1316 = vpop.f32.mrb[0].mxu0
        %1317 = vdwg.mxu0
        %v1318 = vadd.f32 %v1305, %v1310
        %v1319 = vadd.f32 %v1318, %v1315
        %1320 = vadd.xlane.f32.xlu0 %v1319
        %v1321 = vpop.xlane.xlu0 %1320
        %v1322 = vrot.slane %v1321, 4
        %v1323 = vadd.f32 %v1321, %v1322
        %v1324 = vrot.slane %v1323, 2
        %v1325 = vadd.f32 %v1323, %v1324
        %v1326 = vrot.slane %v1325, 1
        %v1327 = vadd.f32 %v1325, %v1326
        %s1328 = vtos %v1327
        %v1329 = vrcp.pop 3072.0
        %s1330 = vtos %v1329
        %s1331 = smul.f32 %s1328, %s1330
        %v1332 = vmul.f32 %v1305, %v1305
        %v1333 = vmul.f32 %v1310, %v1310
        %v1334 = vmul.f32 %v1315, %v1315
        %v1335 = vadd.f32 %v1332, %v1333
        %v1336 = vadd.f32 %v1335, %v1334
        %1337 = vadd.xlane.f32.xlu0 %v1336
        %v1338 = vpop.xlane.xlu0 %1337
        %v1339 = vrot.slane %v1338, 4
        %v1340 = vadd.f32 %v1338, %v1339
        %v1341 = vrot.slane %v1340, 2
        %v1342 = vadd.f32 %v1340, %v1341
        %v1343 = vrot.slane %v1342, 1
        %v1344 = vadd.f32 %v1342, %v1343
        %s1345 = vtos %v1344
        %v1346 = vrcp.pop 3072.0
        %s1347 = vtos %v1346
        %s1348 = smul.f32 %s1345, %s1347
        %s1349 = smul.f32 %s1331, %s1331
        %s1350 = ssub.f32 %s1348, %s1349
        %v1351 = vstv %s1331
        %v1352 = vsub.f32 %v1305, %v1351
        %v1353 = vsub.f32 %v1310, %v1351
        %v1354 = vsub.f32 %v1315, %v1351
        %s1355 = sadd.f32 %s1350, 1e-05
        %v1356 = vstv %s1355
        %v1357 = vrsqrt.pop %v1356
        %s1358 = vtos %v1357
        %v1359 = vstv %s1358
        %v1360 = vmul.f32 %v1352, %v1359
        %v1361 = vmul.f32 %v1353, %v1359
        %v1362 = vmul.f32 %v1354, %v1359
        %v1363 = vld [vmem:[#allocation7] sm:$0xff]
        %v1364 = vld [vmem:[#allocation7 + $0x8] sm:$0xff]
        %v1365 = vld [vmem:[#allocation7 + $0x10] sm:$0xff]
        %v1366 = vmul.f32 %v1360, %v1363
        %v1367 = vmul.f32 %v1361, %v1364
        %v1368 = vmul.f32 %v1362, %v1365
        %v1369 = vld [vmem:[#allocation8] sm:$0xff]
        %v1370 = vld [vmem:[#allocation8 + $0x8] sm:$0xff]
        %v1371 = vld [vmem:[#allocation8 + $0x10] sm:$0xff]
        %v1372 = vadd.f32 %v1366, %v1369
        %v1373 = vadd.f32 %v1367, %v1370
        %v1374 = vadd.f32 %v1368, %v1371
        %v1375 = vmax.f32 %v1372, 0.0
        %v1376 = vmax.f32 %v1373, 0.0
        %v1377 = vmax.f32 %v1374, 0.0
        %v1378 = vadd.f32 %v1375, 0.0
        %v1379 = vadd.f32 %v1376, 0.0
        %v1380 = vadd.f32 %v1377, 0.0
        %1381 = vmatprep.subr.mxu0 0.0
        %1382 = vmatpush1.xpose.msra.mxu0 %v977
        %1383 = vmatprep.subr.mxu0 0.0
        %1384 = vmatpush1.xpose.msra.mxu0 %v983
        %1385 = vmatprep.subr.mxu0 0.0
        %1386 = vmatpush1.xpose.msra.mxu0 %v989
        %1387 = vmatprep.subr.mxu0 0.0
        %1388 = vmatpush1.xpose.msra.mxu0 0.0
        %1389 = vmatprep.subr.mxu0 0.0
        %1390 = vmatpush1.xpose.msra.mxu0 0.0
        %1391 = vmatprep.subr.mxu0 0.0
        %1392 = vmatpush1.xpose.msra.mxu0 0.0
        %1393 = vmatprep.subr.mxu0 0.0
        %1394 = vmatpush1.xpose.msra.mxu0 0.0
        %1395 = vmatprep.subr.mxu0 0.0
        %1396 = vmatpush1.xpose.msra.mxu0 0.0
        %1397 = vmatprep.subr.mxu0 0.0
        %1398 = vmatpush1.xpose.msra.mxu0 0.0
        %1399 = vmatprep.subr.mxu0 0.0
        %1400 = vmatpush1.xpose.msra.mxu0 0.0
        %1401 = vmatprep.subr.mxu0 0.0
        %1402 = vmatpush1.xpose.msra.mxu0 0.0
        %1403 = vmatprep.subr.mxu0 0.0
        %1404 = vmatpush1.xpose.msra.mxu0 0.0
        %1405 = vmatprep.subr.mxu0 0.0
        %1406 = vmatpush1.xpose.msra.mxu0 0.0
        %1407 = vmatprep.subr.mxu0 0.0
        %1408 = vmatpush1.xpose.msra.mxu0 0.0
        %1409 = vmatprep.subr.mxu0 0.0
        %1410 = vmatpush1.xpose.msra.mxu0 0.0
        %1411 = vmatprep.subr.mxu0 0.0
        %1412 = vmatpush1.xpose.msra.mxu0 0.0
        %1413 = vmatprep.subr.mxu0 0.0
        %1414 = vmatpush1.xpose.msra.mxu0 0.0
        %1415 = vmatprep.subr.mxu0 0.0
        %1416 = vmatpush1.xpose.msra.mxu0 0.0
        %1417 = vmatprep.subr.mxu0 0.0
        %1418 = vmatpush1.xpose.msra.mxu0 0.0
        %1419 = vmatprep.subr.mxu0 0.0
        %1420 = vmatpush1.xpose.msra.mxu0 0.0
        %1421 = vmatprep.subr.mxu0 0.0
        %1422 = vmatpush1.xpose.msra.mxu0 0.0
        %1423 = vmatprep.subr.mxu0 0.0
        %1424 = vmatpush1.xpose.msra.mxu0 0.0
        %1425 = vmatprep.subr.mxu0 0.0
        %1426 = vmatpush1.xpose.msra.mxu0 0.0
        %1427 = vmatprep.subr.mxu0 0.0
        %1428 = vmatpush1.xpose.msra.mxu0 0.0
        %1429 = vmatprep.subr.mxu0 0.0
        %1430 = vmatpush1.xpose.msra.mxu0 0.0
        %1431 = vmatprep.subr.mxu0 0.0
        %1432 = vmatpush1.xpose.msra.mxu0 0.0
        %1433 = vmatprep.subr.mxu0 0.0
        %1434 = vmatpush1.xpose.msra.mxu0 0.0
        %1435 = vmatprep.subr.mxu0 0.0
        %1436 = vmatpush1.xpose.msra.mxu0 0.0
        %1437 = vmatprep.subr.mxu0 0.0
        %1438 = vmatpush1.xpose.msra.mxu0 0.0
        %1439 = vmatprep.subr.mxu0 0.0
        %1440 = vmatpush1.xpose.msra.mxu0 0.0
        %1441 = vmatprep.subr.mxu0 0.0
        %1442 = vmatpush1.xpose.msra.mxu0 0.0
        %1443 = vmatprep.subr.mxu0 0.0
        %1444 = vmatpush1.xpose.msra.mxu0 0.0
        %1445 = vmatprep.mubr.f32.mxu0 0.0
        %1446 = vmatmul.mubr.f32.gmra.mrb[0].mxu0 %v975
        %v1447 = vpop.f32.mrb[0].mxu0
        %v1448 = vadd.f32 0.0, %v1447
        %v1449 = vpop.f32.mrb[0].mxu0
        %1450 = vmatprep.mubr.f32.mxu0 0.0
        %1451 = vmatmul.mubr.f32.gmra.mrb[0].mxu0 %v981
        %v1452 = vpop.f32.mrb[0].mxu0
        %v1453 = vadd.f32 0.0, %v1452
        %v1454 = vpop.f32.mrb[0].mxu0
        %1455 = vmatprep.mubr.f32.mxu0 0.0
        %1456 = vmatmul.mubr.f32.gmra.mrb[0].mxu0 %v987
        %v1457 = vpop.f32.mrb[0].mxu0
        %v1458 = vadd.f32 0.0, %v1457
        %v1459 = vpop.f32.mrb[0].mxu0
        %1460 = vdwg.mxu0
        %v1461 = vmul.f32 %v1448, 0.088388346
        %v1462 = vmul.f32 %v1453, 0.088388346
        %v1463 = vmul.f32 %v1458, 0.088388346
        %v1464 = vsel %vm1189, -1e+30, %v1461
        %v1465 = vsel %vm1190, -1e+30, %v1462
        %v1466 = vsel %vm1191, -1e+30, %v1463
        %v1467 = vsel %vm1195, %v1464, -inf
        %1468 = vmax.xlane.f32.xlu0 %v1467
        %v1469 = vpop.xlane.xlu0 %1468
        %v1470 = vsel %vm1195, %v1465, -inf
        %1471 = vmax.xlane.f32.xlu0 %v1470
        %v1472 = vpop.xlane.xlu0 %1471
        %v1473 = vsel %vm1195, %v1466, -inf
        %1474 = vmax.xlane.f32.xlu0 %v1473
        %v1475 = vpop.xlane.xlu0 %1474
        %v1476 = vsub.f32 %v1464, %v1469
        %v1477 = vsub.f32 %v1465, %v1472
        %v1478 = vsub.f32 %v1466, %v1475
        %v1479 = vmul.f32 %v1476, 1.442695
        %v1480 = vpow.pop %v1479
        %v1481 = vmul.f32 %v1477, 1.442695
        %v1482 = vpow.pop %v1481
        %v1483 = vmul.f32 %v1478, 1.442695
        %v1484 = vpow.pop %v1483
        %v1485 = vsel %vm1195, %v1480, 0.0
        %1486 = vadd.xlane.f32.xlu0 %v1485
        %v1487 = vpop.xlane.xlu0 %1486
        %v1488 = vsel %vm1195, %v1482, 0.0
        %1489 = vadd.xlane.f32.xlu0 %v1488
        %v1490 = vpop.xlane.xlu0 %1489
        %v1491 = vsel %vm1195, %v1484, 0.0
        %1492 = vadd.xlane.f32.xlu0 %v1491
        %v1493 = vpop.xlane.xlu0 %1492
        %v1494 = vrcp.pop %v1487
        %v1495 = vrcp.pop %v1490
        %v1496 = vrcp.pop %v1493
        %v1497 = vmul.f32 %v1480, %v1494
        %v1498 = vmul.f32 %v1482, %v1495
        %v1499 = vmul.f32 %v1484, %v1496
        %v1501 = vsel %vm1195, %v1497, 0
        %v1504 = vsel %vm1195, %v1498, 0
        %v1507 = vsel %vm1195, %v1499, 0
        %1509 = vmatprep.subr.mxu0 0.0
        %1510 = vmatpush1.msra.mxu0 %v1092
        %1511 = vmatprep.subr.mxu0 0.0
        %1512 = vmatpush1.msra.mxu0 %v1098
        %1513 = vmatprep.subr.mxu0 0.0
        %1514 = vmatpush1.msra.mxu0 %v1104
        %1515 = vmatprep.subr.mxu0 0.0
        %1516 = vmatpush1.msra.mxu0 0.0
        %1517 = vmatprep.subr.mxu0 0.0
        %1518 = vmatpush1.msra.mxu0 0.0
        %1519 = vmatprep.subr.mxu0 0.0
        %1520 = vmatpush1.msra.mxu0 0.0
        %1521 = vmatprep.subr.mxu0 0.0
        %1522 = vmatpush1.msra.mxu0 0.0
        %1523 = vmatprep.subr.mxu0 0.0
        %1524 = vmatpush1.msra.mxu0 0.0
        %1525 = vmatprep.subr.mxu0 0.0
        %1526 = vmatpush1.msra.mxu0 0.0
        %1527 = vmatprep.subr.mxu0 0.0
        %1528 = vmatpush1.msra.mxu0 0.0
        %1529 = vmatprep.subr.mxu0 0.0
        %1530 = vmatpush1.msra.mxu0 0.0
        %1531 = vmatprep.subr.mxu0 0.0
        %1532 = vmatpush1.msra.mxu0 0.0
        %1533 = vmatprep.subr.mxu0 0.0
        %1534 = vmatpush1.msra.mxu0 0.0
        %1535 = vmatprep.subr.mxu0 0.0
        %1536 = vmatpush1.msra.mxu0 0.0
        %1537 = vmatprep.subr.mxu0 0.0
        %1538 = vmatpush1.msra.mxu0 0.0
        %1539 = vmatprep.subr.mxu0 0.0
        %1540 = vmatpush1.msra.mxu0 0.0
        %1541 = vmatprep.subr.mxu0 0.0
        %1542 = vmatpush1.msra.mxu0 0.0
        %1543 = vmatprep.subr.mxu0 0.0
        %1544 = vmatpush1.msra.mxu0 0.0
        %1545 = vmatprep.subr.mxu0 0.0
        %1546 = vmatpush1.msra.mxu0 0.0
        %1547 = vmatprep.subr.mxu0 0.0
        %1548 = vmatpush1.msra.mxu0 0.0
        %1549 = vmatprep.subr.mxu0 0.0
        %1550 = vmatpush1.msra.mxu0 0.0
        %1551 = vmatprep.subr.mxu0 0.0
        %1552 = vmatpush1.msra.mxu0 0.0
        %1553 = vmatprep.subr.mxu0 0.0
        %1554 = vmatpush1.msra.mxu0 0.0
        %1555 = vmatprep.subr.mxu0 0.0
        %1556 = vmatpush1.msra.mxu0 0.0
        %1557 = vmatprep.subr.mxu0 0.0
        %1558 = vmatpush1.msra.mxu0 0.0
        %1559 = vmatprep.subr.mxu0 0.0
        %1560 = vmatpush1.msra.mxu0 0.0
        %1561 = vmatprep.subr.mxu0 0.0
        %1562 = vmatpush1.msra.mxu0 0.0
        %1563 = vmatprep.subr.mxu0 0.0
        %1564 = vmatpush1.msra.mxu0 0.0
        %1565 = vmatprep.subr.mxu0 0.0
        %1566 = vmatpush1.msra.mxu0 0.0
        %1567 = vmatprep.subr.mxu0 0.0
        %1568 = vmatpush1.msra.mxu0 0.0
        %1569 = vmatprep.subr.mxu0 0.0
        %1570 = vmatpush1.msra.mxu0 0.0
        %1571 = vmatprep.subr.mxu0 0.0
        %1572 = vmatpush1.msra.mxu0 0.0
        %1573 = vmatprep.mubr.f32.mxu0 0.0
        %1574 = vmatmul.mubr.f32.gmra.mrb[0].mxu0 %v1501
        %v1575 = vpop.f32.mrb[0].mxu0
        %v1576 = vadd.f32 0.0, %v1575
        %v1577 = vpop.f32.mrb[0].mxu0
        %1578 = vmatprep.mubr.f32.mxu0 0.0
        %1579 = vmatmul.mubr.f32.gmra.mrb[0].mxu0 %v1504
        %v1580 = vpop.f32.mrb[0].mxu0
        %v1581 = vadd.f32 0.0, %v1580
        %v1582 = vpop.f32.mrb[0].mxu0
        %1583 = vmatprep.mubr.f32.mxu0 0.0
        %1584 = vmatmul.mubr.f32.gmra.mrb[0].mxu0 %v1507
        %v1585 = vpop.f32.mrb[0].mxu0
        %v1586 = vadd.f32 0.0, %v1585
        %v1587 = vpop.f32.mrb[0].mxu0
        %1588 = vdwg.mxu0
        %v1589 = vadd.f32 %v1576, %v1581
        %v1590 = vadd.f32 %v1589, %v1586
        %1591 = vadd.xlane.f32.xlu0 %v1590
        %v1592 = vpop.xlane.xlu0 %1591
        %v1593 = vrot.slane %v1592, 4
        %v1594 = vadd.f32 %v1592, %v1593
        %v1595 = vrot.slane %v1594, 2
        %v1596 = vadd.f32 %v1594, %v1595
        %v1597 = vrot.slane %v1596, 1
        %v1598 = vadd.f32 %v1596, %v1597
        %s1599 = vtos %v1598
        %v1600 = vrcp.pop 3072.0
        %s1601 = vtos %v1600
        %s1602 = smul.f32 %s1599, %s1601
        %v1603 = vmul.f32 %v1576, %v1576
        %v1604 = vmul.f32 %v1581, %v1581
        %v1605 = vmul.f32 %v1586, %v1586
        %v1606 = vadd.f32 %v1603, %v1604
        %v1607 = vadd.f32 %v1606, %v1605
        %1608 = vadd.xlane.f32.xlu0 %v1607
        %v1609 = vpop.xlane.xlu0 %1608
        %v1610 = vrot.slane %v1609, 4
        %v1611 = vadd.f32 %v1609, %v1610
        %v1612 = vrot.slane %v1611, 2
        %v1613 = vadd.f32 %v1611, %v1612
        %v1614 = vrot.slane %v1613, 1
        %v1615 = vadd.f32 %v1613, %v1614
        %s1616 = vtos %v1615
        %v1617 = vrcp.pop 3072.0
        %s1618 = vtos %v1617
        %s1619 = smul.f32 %s1616, %s1618
        %s1620 = smul.f32 %s1602, %s1602
        %s1621 = ssub.f32 %s1619, %s1620
        %v1622 = vstv %s1602
        %v1623 = vsub.f32 %v1576, %v1622
        %v1624 = vsub.f32 %v1581, %v1622
        %v1625 = vsub.f32 %v1586, %v1622
        %s1626 = sadd.f32 %s1621, 1e-05
        %v1627 = vstv %s1626
        %v1628 = vrsqrt.pop %v1627
        %s1629 = vtos %v1628
        %v1630 = vstv %s1629
        %v1631 = vmul.f32 %v1623, %v1630
        %v1632 = vmul.f32 %v1624, %v1630
        %v1633 = vmul.f32 %v1625, %v1630
        %s1634 = scalar_lea.vmem [#allocation7], 24
        %v1635 = vld [vmem:[%s1634] sm:$0xff]
        %v1636 = vld [vmem:[%s1634 + $0x8] sm:$0xff]
        %v1637 = vld [vmem:[%s1634 + $0x10] sm:$0xff]
        %v1638 = vmul.f32 %v1631, %v1635
        %v1639 = vmul.f32 %v1632, %v1636
        %v1640 = vmul.f32 %v1633, %v1637
        %s1641 = scalar_lea.vmem [#allocation8], 24
        %v1642 = vld [vmem:[%s1641] sm:$0xff]
        %v1643 = vld [vmem:[%s1641 + $0x8] sm:$0xff]
        %v1644 = vld [vmem:[%s1641 + $0x10] sm:$0xff]
        %v1645 = vadd.f32 %v1638, %v1642
        %v1646 = vadd.f32 %v1639, %v1643
        %v1647 = vadd.f32 %v1640, %v1644
        %v1648 = vmax.f32 %v1645, 0.0
        %v1649 = vmax.f32 %v1646, 0.0
        %v1650 = vmax.f32 %v1647, 0.0
        %v1651 = vadd.f32 %v1378, %v1648
        %v1652 = vadd.f32 %v1379, %v1649
        %v1653 = vadd.f32 %v1380, %v1650
        %s1654 = sld [smem:[#allocation2]]
        %v1655 = vstv %s1654
        %v1656 = vmul.f32 %v1651, %v1655
        %v1657 = vmul.f32 %v1652, %v1655
        %v1658 = vmul.f32 %v1653, %v1655
        %v1659 = vadd.f32 %v733, %v1656
        %v1660 = vadd.f32 %v734, %v1657
        %v1661 = vadd.f32 %v735, %v1658
        %v1662 = vadd.f32 %v1659, 0.0
        %v1663 = vadd.f32 %v1660, 0.0
        %vm1664 = vcmask 1043456
        %v1665 = vsel %vm1664, %v1660, -inf
        %v1666 = vmax.f32 %v1659, %v1665
        %v1667 = vrot.slane %v1666, 4
        %v1668 = vmax.f32 %v1666, %v1667
        %v1669 = vrot.slane %v1668, 2
        %v1670 = vmax.f32 %v1668, %v1669
        %v1671 = vrot.slane %v1670, 1
        %v1672 = vmax.f32 %v1670, %v1671
        %v1673 = vadd.f32 %v1672, 0.0
        %v1676 = vrot.slane %v1660, 4
        %v1677 = vrot.slane %v1661, 4
        %v1678 = vsel %vm1664, %v1676, %v1677
        %v1681 = vadd.f32 %v1662, %v1678
        %v1682 = vadd.f32 %v1663, %v1677
        %vm1683 = vcmask 1047556
        %v1684 = vsel %vm1683, %v1660, -inf
        %v1685 = vmax.f32 %v1684, %v1661
        %v1686 = vrot.slane %v1685, 4
        %v1687 = vmax.f32 %v1685, %v1686
        %v1688 = vrot.slane %v1687, 2
        %v1689 = vmax.f32 %v1687, %v1688
        %v1690 = vrot.slane %v1689, 1
        %v1691 = vmax.f32 %v1689, %v1690
        %v1692 = vadd.f32 %v1673, %v1691
        %v1693 = vmul.f32 %v1681, 0.5
        %v1694 = vmul.f32 %v1682, 0.5
        %v1695 = vmul.f32 %v1692, 0.5
        %v1696 = vsel %vm1664, %v1694, %v1695
        %vm1697 = vcmask 1044480
        %v1698 = vsel %vm1697, %v1696, 0.0
        %v1699 = vld [vmem:[%s12] sm:$0xff]
        %v1700 = vld [vmem:[%s12 + $0x8] sm:$0xff]
        %v1701 = vld [vmem:[%s12 + $0x10] sm:$0xff]
        %v1702 = vld [vmem:[%s12 + $0x18] sm:$0xff]
        %v1703 = vld [vmem:[%s12 + $0x20] sm:$0xff]
        %v1704 = vld [vmem:[%s12 + $0x28] sm:$0xff]
        %v1705 = vld [vmem:[%s12 + $0x30] sm:$0xff]
        %v1706 = vld [vmem:[%s12 + $0x38] sm:$0xff]
        %v1707 = vld [vmem:[%s12 + $0x40] sm:$0xff]
        %v1708 = vld [vmem:[%s12 + $0x48] sm:$0xff]
        %v1709 = vld [vmem:[%s12 + $0x50] sm:$0xff]
        %v1710 = vld [vmem:[%s12 + $0x58] sm:$0xff]
        %v1711 = vld [vmem:[%s12 + $0x60] sm:$0xff]
        %v1712 = vld [vmem:[%s12 + $0x68] sm:$0xff]
        %v1713 = vld [vmem:[%s12 + $0x70] sm:$0xff]
        %v1714 = vld [vmem:[%s12 + $0x78] sm:$0xff]
        %v1715 = vld [vmem:[%s13] sm:$0x1]
        %v1717 = vlaneseq
        %v1718 = vshrl.u32 %v1717, 7
        %v1719 = vsub.s32 0, %v1718
        %v1720 = vrot.slane %v1715, %v1719
        %1722 = vmatprep.subr.mxu0 0.0
        %1723 = vmatpush1.msra.mxu0 %v1699
        %1724 = vmatprep.subr.mxu0 0.0
        %1725 = vmatpush1.msra.mxu0 %v1700
        %1726 = vmatprep.subr.mxu0 0.0
        %1727 = vmatpush1.msra.mxu0 %v1701
        %1728 = vmatprep.subr.mxu0 0.0
        %1729 = vmatpush1.msra.mxu0 %v1702
        %1730 = vmatprep.subr.mxu0 0.0
        %1731 = vmatpush1.msra.mxu0 %v1703
        %1732 = vmatprep.subr.mxu0 0.0
        %1733 = vmatpush1.msra.mxu0 %v1704
        %1734 = vmatprep.subr.mxu0 0.0
        %1735 = vmatpush1.msra.mxu0 %v1705
        %1736 = vmatprep.subr.mxu0 0.0
        %1737 = vmatpush1.msra.mxu0 %v1706
        %1738 = vmatprep.subr.mxu0 0.0
        %1739 = vmatpush1.msra.mxu0 %v1707
        %1740 = vmatprep.subr.mxu0 0.0
        %1741 = vmatpush1.msra.mxu0 %v1708
        %1742 = vmatprep.subr.mxu0 0.0
        %1743 = vmatpush1.msra.mxu0 %v1709
        %1744 = vmatprep.subr.mxu0 0.0
        %1745 = vmatpush1.msra.mxu0 %v1710
        %1746 = vmatprep.subr.mxu0 0.0
        %1747 = vmatpush1.msra.mxu0 %v1711
        %1748 = vmatprep.subr.mxu0 0.0
        %1749 = vmatpush1.msra.mxu0 %v1712
        %1750 = vmatprep.subr.mxu0 0.0
        %1751 = vmatpush1.msra.mxu0 %v1713
        %1752 = vmatprep.subr.mxu0 0.0
        %1753 = vmatpush1.msra.mxu0 %v1714
        %1754 = vmatprep.subr.mxu0 0.0
        %1755 = vmatpush1.msra.mxu0 0.0
        %1756 = vmatprep.subr.mxu0 0.0
        %1757 = vmatpush1.msra.mxu0 0.0
        %1758 = vmatprep.subr.mxu0 0.0
        %1759 = vmatpush1.msra.mxu0 0.0
        %1760 = vmatprep.subr.mxu0 0.0
        %1761 = vmatpush1.msra.mxu0 0.0
        %1762 = vmatprep.subr.mxu0 0.0
        %1763 = vmatpush1.msra.mxu0 0.0
        %1764 = vmatprep.subr.mxu0 0.0
        %1765 = vmatpush1.msra.mxu0 0.0
        %1766 = vmatprep.subr.mxu0 0.0
        %1767 = vmatpush1.msra.mxu0 0.0
        %1768 = vmatprep.subr.mxu0 0.0
        %1769 = vmatpush1.msra.mxu0 0.0
        %1770 = vmatprep.subr.mxu0 0.0
        %1771 = vmatpush1.msra.mxu0 0.0
        %1772 = vmatprep.subr.mxu0 0.0
        %1773 = vmatpush1.msra.mxu0 0.0
        %1774 = vmatprep.subr.mxu0 0.0
        %1775 = vmatpush1.msra.mxu0 0.0
        %1776 = vmatprep.subr.mxu0 0.0
        %1777 = vmatpush1.msra.mxu0 0.0
        %1778 = vmatprep.subr.mxu0 0.0
        %1779 = vmatpush1.msra.mxu0 0.0
        %1780 = vmatprep.subr.mxu0 0.0
        %1781 = vmatpush1.msra.mxu0 0.0
        %1782 = vmatprep.subr.mxu0 0.0
        %1783 = vmatpush1.msra.mxu0 0.0
        %1784 = vmatprep.subr.mxu0 0.0
        %1785 = vmatpush1.msra.mxu0 0.0
        %1786 = vmatprep.mubr.f32.mxu0 0.0
        %1787 = vmatmul.mubr.f32.gmra.mrb[0].mxu0 %v1693
        %v1788 = vpop.f32.mrb[0].mxu0
        %v1789 = vadd.f32 %v1720, %v1788
        %v1790 = vpop.f32.mrb[0].mxu0
        %1791 = vmatprep.mubr.f32.mxu0 0.0
        %1792 = vmatmul.mubr.f32.gmra.mrb[0].mxu0 %v1698
        %v1793 = vpop.f32.mrb[0].mxu0
        %v1794 = vadd.f32 %v1720, %v1793
        %v1795 = vpop.f32.mrb[0].mxu0
        %1796 = vdwg.mxu0
        %1797 = vst [vmem:[%s547] sm:$0xff] %v1789
        %1798 = vst [vmem:[%s547 + $0x8] sm:$0xff] %v1794
        %p1799 = scmp.lt.s32.totalorder %s29, 1
        %s1800 = scalar_select %p1799, %s29, 1
        %s1801 = smul.addr %s1800, 2
        %s1802 = smul.addr %s1801, 8
        %s1803 = scalar_lea.vmem %s14, %s1802
        // Predicated region
        $region93: #{gcnnet_volleyball_forward.1} parent=75 // pred_check
          %p1804 = pneg %p351
        $region94: #{gcnnet_volleyball_forward.1} parent=75 // pred_check_branch
          %1806 = sbr.rel (%p1804) target = $region96
        $region95: #{gcnnet_volleyball_forward.1} parent=75 // pred_region
          _
        $region96: #{gcnnet_volleyball_forward.1} parent=75 // pred_fallthru
          _
      $region76: #{gcnnet_volleyball_forward.1} parent=5 // pred_fallthru
        _
      %p1807 = scmp.le.s32.totalorder 2, %s24
      // Predicated region
      $region97: #{gcnnet_volleyball_forward.1} parent=5 // pred_check
        %p1808 = pneg %p1807
      $region98: #{gcnnet_volleyball_forward.1} parent=5 // pred_check_branch
        %1810 = sbr.rel (%p1808) target = $region100
      $region99: #{gcnnet_volleyball_forward.1} parent=5 // pred_region
        %s1811 = ssub.s32 %s24, 2
        // Predicated region
        $region101: #{gcnnet_volleyball_forward.1} parent=99 // pred_check
          %p1812 = pneg %p357
        $region102: #{gcnnet_volleyball_forward.1} parent=99 // pred_check_branch
          %1814 = sbr.rel (%p1812) target = $region104
        $region103: #{gcnnet_volleyball_forward.1} parent=99 // pred_region
          %p1815 = scmp.lt.s32.totalorder %s30, 1
          %s1816 = scalar_select %p1815, %s30, 1
          %s1817 = smul.addr %s1816, 2
          %s1818 = smul.addr %s1817, 8
          %s1819 = scalar_lea.vmem %s14, %s1818
        $region104: #{gcnnet_volleyball_forward.1} parent=99 // pred_fallthru
          _
      $region100: #{gcnnet_volleyball_forward.1} parent=5 // pred_fallthru
        _
    $region6: #{gcnnet_volleyball_forward.1} parent=1 // loop_footer
      %s28 = sadd.s32 1, %s24
    $region7: #{gcnnet_volleyball_forward.1} parent=1 // loop_footer_branch
      %23 = sbr.rel target = $region3
    $region8: #{gcnnet_volleyball_forward.1} parent=1 // loop_exit
      _
    %1820 = vsyncpa [#allocation4], 1
    %s1821 = scalar_lea.sflag [#allocation4], 1
    %1822 = vsyncpa %s1821, 1
    %1823 = vsyncpa [#allocation6], 1
    %1824 = vsyncpa [#allocation9], 1

</llo_original>
